<compile_context>
chip_gen: v5e
topology: v5e:2x2
jax: 0.10.0
libtpu: 0.0.40
codegen_flags: <defaults>
</compile_context>

<pallas_src>
import functools

import jax
import jax.numpy as jnp
import numpy as np
from jax.experimental import pallas as pl
from jax.experimental.pallas import tpu as pltpu

VOCAB = 16    # input_size
HIDDEN = 32   # hidden_size
OUTPUT = 10   # output_size
BATCH = 2
SEQ = 8

OUT_PAD = 128   # lane-dense output width (sliced back to OUTPUT in the wrapper)
SUBLANE = 8     # batch padded to a full sublane tile


def g2p_kernel(Bp, tok_f_ref, tok_b_ref, gitab_ref, whh_ref, bhhn_ref,
               wout_ref, bout_ref, logits_ref, gi_ref, hs_ref):
    """Fused bidirectional GRU recurrence + deferred lane-dense projection.

    tok_f_ref:  (T*Bp, 1) int32   forward token at loop row t*Bp+b
    tok_b_ref:  (T*Bp, 1) int32   backward token (offset by +VOCAB)
    gitab_ref:  (2*VOCAB, 6H)     gate-input tables, columns permuted to
                                  [r_f r_b z_f z_b n_f n_b]; r/z already
                                  include b_hh_r / b_hh_z
    whh_ref:    (2H, 6H) bf16     block-diagonal fused hidden->hidden weight
    bhhn_ref:   (1, 2H)           n-gate hidden bias [b_hn_f | b_hn_b]
    wout_ref:   (2H, OUT_PAD)     Linear(2H, O) weight^T, lane-padded
    bout_ref:   (1, OUT_PAD)
    logits_ref: (T*Bp, OUT_PAD)   lane-dense output
    gi_ref:     (T*Bp, 6H)  VMEM scratch - per-step gate inputs
    hs_ref:     (T*Bp, 2H)  VMEM scratch - hidden states in output-time order
    """
    TB = gi_ref.shape[0]
    T = TB // Bp
    H2 = hs_ref.shape[1]          # 2H (fused fwd|bwd)
    H = H2 // 2
    V2 = gitab_ref.shape[0]       # 2*VOCAB

    # ---- prologue (off the serial chain): fused one-hot gather of gate inputs.
    lane = jax.lax.broadcasted_iota(jnp.int32, (TB, V2), 1)
    onehot = ((lane == tok_f_ref[...]) |
              (lane == tok_b_ref[...])).astype(jnp.float32)
    gi_ref[...] = jnp.dot(onehot, gitab_ref[...],
                          preferred_element_type=jnp.float32)

    whh = whh_ref[...]                                  # (2H, 6H) bf16, resident
    bhh_n = jnp.broadcast_to(bhhn_ref[...], (Bp, H2))   # hoisted broadcast

    h = jnp.zeros((Bp, H2), jnp.float32)                # [h_f | h_b]

    # ---- recurrence: ONE bf16 MXU push per step covering both directions.
    for t in range(T):
        gi = gi_ref[t * Bp:(t + 1) * Bp, :]                         # (Bp, 6H)
        gh = jnp.dot(h.astype(jnp.bfloat16), whh,
                     preferred_element_type=jnp.float32)            # (Bp, 6H)
        rz = jax.nn.sigmoid(gi[:, :2 * H2] + gh[:, :2 * H2])        # (Bp, 4H)
        r = rz[:, :H2]
        z = rz[:, H2:]
        n = jnp.tanh(gi[:, 2 * H2:] + r * (gh[:, 2 * H2:] + bhh_n))
        h = n + z * (h - n)
        # Stream hidden state to VMEM scratch: fwd half belongs to output time
        # t, bwd half to output time T-1-t (drains under MXU/EUP latency).
        hs_ref[t * Bp:(t + 1) * Bp, :H] = h[:, :H]
        hs_ref[(T - 1 - t) * Bp:(T - t) * Bp, H:] = h[:, H:]

    # ---- deferred, lane-dense output projection: one fused matmul + bias.
    logits_ref[...] = (jnp.dot(hs_ref[...], wout_ref[...],
                               preferred_element_type=jnp.float32)
                       + bout_ref[...])


def init_params(key):
    """Deterministic synthetic parameters in torch layout (gate order [r,z,n])."""
    ks = jax.random.split(key, 11)
    scale = 0.1
    rnd = lambda k, s: jax.random.normal(k, s, jnp.float32) * scale
    H, O = HIDDEN, OUTPUT
    return {
        "embedding": rnd(ks[0], (VOCAB, H)),
        # bidirectional torch.nn.GRU stacked weights
        "w_ih_f": rnd(ks[1], (3 * H, H)),
        "w_hh_f": rnd(ks[2], (3 * H, H)),
        "b_ih_f": rnd(ks[3], (3 * H,)),
        "b_hh_f": rnd(ks[4], (3 * H,)),
        "w_ih_b": rnd(ks[5], (3 * H, H)),
        "w_hh_b": rnd(ks[6], (3 * H, H)),
        "b_ih_b": rnd(ks[7], (3 * H,)),
        "b_hh_b": rnd(ks[8], (3 * H,)),
        # nn.Linear(2H, O)
        "w_out": rnd(ks[9], (O, 2 * H)),
        "b_out": rnd(ks[10], (O,)),
    }


def prepare_kernel_params(params):
    """One-time parameter transform: torch layout -> fused kernel layout.

    Folds embedding @ W_ih^T + b_ih (+ the purely-additive b_hh_r / b_hh_z)
    into per-token gate-input tables, builds the block-diagonal direction-fused
    hidden weight with columns permuted to [r_f r_b z_f z_b n_f n_b], and
    lane-pads the fused output projection.
    """
    H, O, V = HIDDEN, OUTPUT, VOCAB

    gi_f = params["embedding"] @ params["w_ih_f"].T + params["b_ih_f"]   # (V, 3H)
    gi_b = params["embedding"] @ params["w_ih_b"].T + params["b_ih_b"]
    gi_f = gi_f.at[:, :2 * H].add(params["b_hh_f"][:2 * H])   # fold b_hr, b_hz
    gi_b = gi_b.at[:, :2 * H].add(params["b_hh_b"][:2 * H])

    rf, zf, nf = gi_f[:, :H], gi_f[:, H:2 * H], gi_f[:, 2 * H:]
    rb, zb, nb = gi_b[:, :H], gi_b[:, H:2 * H], gi_b[:, 2 * H:]
    zeros_vh = jnp.zeros((V, H), jnp.float32)
    gitab_f = jnp.concatenate([rf, zeros_vh, zf, zeros_vh, nf, zeros_vh], axis=1)
    gitab_b = jnp.concatenate([zeros_vh, rb, zeros_vh, zb, zeros_vh, nb], axis=1)
    gitab = jnp.concatenate([gitab_f, gitab_b], axis=0)        # (2V, 6H)

    # Block-diagonal fused hidden weight, columns [r_f r_b z_f z_b n_f n_b].
    whh_f_t = params["w_hh_f"].T    # (H, 3H) cols [r_f z_f n_f]
    whh_b_t = params["w_hh_b"].T
    W = jnp.zeros((2 * H, 6 * H), jnp.float32)
    W = W.at[:H, 0 * H:1 * H].set(whh_f_t[:, :H])
    W = W.at[H:, 1 * H:2 * H].set(whh_b_t[:, :H])
    W = W.at[:H, 2 * H:3 * H].set(whh_f_t[:, H:2 * H])
    W = W.at[H:, 3 * H:4 * H].set(whh_b_t[:, H:2 * H])
    W = W.at[:H, 4 * H:5 * H].set(whh_f_t[:, 2 * H:])
    W = W.at[H:, 5 * H:6 * H].set(whh_b_t[:, 2 * H:])

    bhh_n = jnp.concatenate([params["b_hh_f"][2 * H:],
                             params["b_hh_b"][2 * H:]])[None, :]   # (1, 2H)

    wout = jnp.zeros((2 * H, OUT_PAD), jnp.float32).at[:, :O].set(params["w_out"].T)
    b_out = jnp.zeros((1, OUT_PAD), jnp.float32).at[0, :O].set(params["b_out"])

    return {
        "gitab": gitab.astype(jnp.float32),       # (2V, 6H)
        "whh": W.astype(jnp.bfloat16),            # (2H, 6H) bf16 -> single MXU pass
        "bhh_n": bhh_n.astype(jnp.float32),       # (1, 2H)
        "wout": wout,                             # (2H, OUT_PAD)
        "b_out": b_out,                           # (1, OUT_PAD)
    }


def g2p_forward(tokens, kparams):
    """tokens: (B, T) int32 -> logits (B, T, OUTPUT) float32."""
    B, T = tokens.shape
    Bp = ((B + SUBLANE - 1) // SUBLANE) * SUBLANE
    tok = jnp.pad(tokens, ((0, Bp - B), (0, 0)))                       # (Bp, T)
    # Tiny int32 plumbing only (the GI gather itself happens in-kernel).
    tok_f = jnp.transpose(tok).reshape(T * Bp, 1).astype(jnp.int32)
    tok_b = (jnp.transpose(tok[:, ::-1]).reshape(T * Bp, 1) + VOCAB).astype(jnp.int32)

    logits_flat = pl.pallas_call(
        functools.partial(g2p_kernel, Bp),
        out_shape=jax.ShapeDtypeStruct((T * Bp, OUT_PAD), jnp.float32),
        in_specs=[pl.BlockSpec(memory_space=pltpu.MemorySpace.VMEM)] * 7,
        out_specs=pl.BlockSpec(memory_space=pltpu.MemorySpace.VMEM),
        scratch_shapes=[pltpu.VMEM((T * Bp, 6 * HIDDEN), jnp.float32),
                        pltpu.VMEM((T * Bp, 2 * HIDDEN), jnp.float32)],
    )(tok_f, tok_b,
      kparams["gitab"], kparams["whh"], kparams["bhh_n"],
      kparams["wout"], kparams["b_out"])

    logits = logits_flat.reshape(T, Bp, OUT_PAD)[:, :B, :OUTPUT]
    return jnp.transpose(logits, (1, 0, 2))                            # (B, T, O)


def g2p_reference(tokens, params):
    """Pure-JAX reference reproducing torch embedding -> biGRU -> Linear."""
    H = HIDDEN
    emb = jnp.take(params["embedding"], tokens, axis=0)                # (B, T, H)
    B, T, _ = emb.shape

    def cell(x, h, wih, whh, bih, bhh):
        gi = x @ wih.T + bih
        gh = h @ whh.T + bhh
        r = jax.nn.sigmoid(gi[:, :H] + gh[:, :H])
        z = jax.nn.sigmoid(gi[:, H:2 * H] + gh[:, H:2 * H])
        n = jnp.tanh(gi[:, 2 * H:] + r * gh[:, 2 * H:])
        return (1.0 - z) * n + z * h

    h = jnp.zeros((B, H), jnp.float32)
    fwd = []
    for t in range(T):
        h = cell(emb[:, t], h, params["w_ih_f"], params["w_hh_f"],
                 params["b_ih_f"], params["b_hh_f"])
        fwd.append(h)
    h = jnp.zeros((B, H), jnp.float32)
    bwd = [None] * T
    for t in range(T - 1, -1, -1):
        h = cell(emb[:, t], h, params["w_ih_b"], params["w_hh_b"],
                 params["b_ih_b"], params["b_hh_b"])
        bwd[t] = h
    enc = jnp.concatenate([jnp.stack(fwd, 1), jnp.stack(bwd, 1)], axis=-1)
    return enc @ params["w_out"].T + params["b_out"]


if __name__ == "__main__":
    key = jax.random.PRNGKey(0)
    pkey, tkey = jax.random.split(key)
    params = init_params(pkey)
    kparams = prepare_kernel_params(params)
    tokens = jax.random.randint(tkey, (BATCH, SEQ), 0, VOCAB, dtype=jnp.int32)

    logits = jax.block_until_ready(g2p_forward(tokens, kparams))
    assert logits.shape == (BATCH, SEQ, OUTPUT)

    ref = jax.block_until_ready(g2p_reference(tokens, params))
    # bf16 recurrent-matmul operands compound over T steps -> relaxed tolerance.
    np.testing.assert_allclose(np.asarray(logits), np.asarray(ref),
                               atol=1e-2, rtol=1e-2)
    print("KERNEL_OK")
</pallas_src>

<mosaic_0001>
module attributes {stable_mosaic.version = 11 : i64} {
  func.func @g2p_kernel(%arg0: memref<64x1xi32, #tpu.memory_space<vmem>>, %arg1: memref<64x1xi32, #tpu.memory_space<vmem>>, %arg2: memref<32x192xf32, #tpu.memory_space<vmem>>, %arg3: memref<64x192xbf16, #tpu.memory_space<vmem>>, %arg4: memref<1x64xf32, #tpu.memory_space<vmem>>, %arg5: memref<64x128xf32, #tpu.memory_space<vmem>>, %arg6: memref<1x128xf32, #tpu.memory_space<vmem>>, %arg7: memref<64x128xf32, #tpu.memory_space<vmem>>, %arg8: memref<64x192xf32, #tpu.memory_space<vmem>>, %arg9: memref<64x64xf32, #tpu.memory_space<vmem>>) attributes {dimension_semantics = [], scalar_prefetch = 0 : i64, scratch_operands = 2 : i64, tpu.core_type = #tpu.core_type<tc>} {
    %0 = tpu.iota {dimensions = array<i32: 1>} : vector<64x32xi32>
    %c0 = arith.constant 0 : index
    %c0_0 = arith.constant 0 : index
    %1 = vector.load %arg0[%c0, %c0_0] : memref<64x1xi32, #tpu.memory_space<vmem>>, vector<64x1xi32>
    %2 = vector.broadcast %1 : vector<64x1xi32> to vector<64x32xi32>
    %3 = arith.cmpi eq, %0, %2 : vector<64x32xi32>
    %c0_1 = arith.constant 0 : index
    %c0_2 = arith.constant 0 : index
    %4 = vector.load %arg1[%c0_1, %c0_2] : memref<64x1xi32, #tpu.memory_space<vmem>>, vector<64x1xi32>
    %5 = vector.broadcast %4 : vector<64x1xi32> to vector<64x32xi32>
    %6 = arith.cmpi eq, %0, %5 : vector<64x32xi32>
    %7 = arith.ori %3, %6 : vector<64x32xi1>
    %8 = arith.extui %7 : vector<64x32xi1> to vector<64x32xi32>
    %9 = arith.sitofp %8 : vector<64x32xi32> to vector<64x32xf32>
    %c0_3 = arith.constant 0 : index
    %c0_4 = arith.constant 0 : index
    %10 = vector.load %arg2[%c0_3, %c0_4] : memref<32x192xf32, #tpu.memory_space<vmem>>, vector<32x192xf32>
    %cst = arith.constant dense<0.000000e+00> : vector<64x192xf32>
    %11 = tpu.matmul %9, %10, %cst {dimension_numbers = #tpu.dot_dimension_numbers<[1], [0], [0], [1], [0, 0, 1, 1], [], []>} : vector<64x32xf32>, vector<32x192xf32>, vector<64x192xf32> -> vector<64x192xf32>
    %c0_5 = arith.constant 0 : index
    %c0_6 = arith.constant 0 : index
    %12 = vector.load %arg8[%c0_5, %c0_6] : memref<64x192xf32, #tpu.memory_space<vmem>>, vector<64x192xf32>
    tpu.vector_store %arg8[%c0_5, %c0_6], %11 {strides = array<i32>} : memref<64x192xf32, #tpu.memory_space<vmem>>, vector<64x192xf32>,
    %c0_7 = arith.constant 0 : index
    %c0_8 = arith.constant 0 : index
    %13 = vector.load %arg3[%c0_7, %c0_8] : memref<64x192xbf16, #tpu.memory_space<vmem>>, vector<64x192xbf16>
    %c0_9 = arith.constant 0 : index
    %c0_10 = arith.constant 0 : index
    %14 = vector.load %arg4[%c0_9, %c0_10] : memref<1x64xf32, #tpu.memory_space<vmem>>, vector<1x64xf32>
    %15 = vector.shape_cast %14 : vector<1x64xf32> to vector<1x64xf32>
    %16 = vector.broadcast %15 : vector<1x64xf32> to vector<8x64xf32>
    %cst_11 = arith.constant 0.000000e+00 : f32
    %17 = vector.broadcast %cst_11 : f32 to vector<8x64xf32>
    %c0_12 = arith.constant 0 : index
    %c0_13 = arith.constant 0 : index
    %18 = vector.load %arg8[%c0_12, %c0_13] : memref<64x192xf32, #tpu.memory_space<vmem>>, vector<8x192xf32>
    %19 = arith.truncf %17 : vector<8x64xf32> to vector<8x64xbf16>
    %cst_14 = arith.constant dense<0.000000e+00> : vector<8x192xf32>
    %20 = tpu.matmul %19, %13, %cst_14 {dimension_numbers = #tpu.dot_dimension_numbers<[1], [0], [0], [1], [0, 0, 1, 1], [], []>} : vector<8x64xbf16>, vector<64x192xbf16>, vector<8x192xf32> -> vector<8x192xf32>
    %21 = vector.extract_strided_slice %18 {offsets = [0, 0], sizes = [8, 128], strides = [1, 1]} : vector<8x192xf32> to vector<8x128xf32>
    %22 = vector.extract_strided_slice %20 {offsets = [0, 0], sizes = [8, 128], strides = [1, 1]} : vector<8x192xf32> to vector<8x128xf32>
    %23 = arith.addf %21, %22 : vector<8x128xf32>
    %24 = arith.negf %23 : vector<8x128xf32>
    %25 = math.exp %24 : vector<8x128xf32>
    %cst_15 = arith.constant 1.000000e+00 : f32
    %26 = vector.broadcast %cst_15 : f32 to vector<8x128xf32>
    %27 = arith.addf %26, %25 : vector<8x128xf32>
    %28 = arith.divf %26, %27 : vector<8x128xf32>
    %29 = vector.extract_strided_slice %28 {offsets = [0, 0], sizes = [8, 64], strides = [1, 1]} : vector<8x128xf32> to vector<8x64xf32>
    %30 = vector.extract_strided_slice %28 {offsets = [0, 64], sizes = [8, 64], strides = [1, 1]} : vector<8x128xf32> to vector<8x64xf32>
    %31 = vector.extract_strided_slice %18 {offsets = [0, 128], sizes = [8, 64], strides = [1, 1]} : vector<8x192xf32> to vector<8x64xf32>
    %32 = vector.extract_strided_slice %20 {offsets = [0, 128], sizes = [8, 64], strides = [1, 1]} : vector<8x192xf32> to vector<8x64xf32>
    %33 = arith.addf %32, %16 : vector<8x64xf32>
    %34 = arith.mulf %29, %33 : vector<8x64xf32>
    %35 = arith.addf %31, %34 : vector<8x64xf32>
    %36 = math.tanh %35 : vector<8x64xf32>
    %37 = arith.subf %17, %36 : vector<8x64xf32>
    %38 = arith.mulf %30, %37 : vector<8x64xf32>
    %39 = arith.addf %36, %38 : vector<8x64xf32>
    %40 = vector.extract_strided_slice %39 {offsets = [0, 0], sizes = [8, 32], strides = [1, 1]} : vector<8x64xf32> to vector<8x32xf32>
    %c0_16 = arith.constant 0 : index
    %c0_17 = arith.constant 0 : index
    %41 = vector.load %arg9[%c0_16, %c0_17] : memref<64x64xf32, #tpu.memory_space<vmem>>, vector<8x32xf32>
    tpu.vector_store %arg9[%c0_16, %c0_17], %40 {strides = array<i32>} : memref<64x64xf32, #tpu.memory_space<vmem>>, vector<8x32xf32>,
    %42 = vector.extract_strided_slice %39 {offsets = [0, 32], sizes = [8, 32], strides = [1, 1]} : vector<8x64xf32> to vector<8x32xf32>
    %c56 = arith.constant 56 : index
    %c32 = arith.constant 32 : index
    %43 = vector.load %arg9[%c56, %c32] : memref<64x64xf32, #tpu.memory_space<vmem>>, vector<8x32xf32>
    tpu.vector_store %arg9[%c56, %c32], %42 {strides = array<i32>} : memref<64x64xf32, #tpu.memory_space<vmem>>, vector<8x32xf32>,
    %c8 = arith.constant 8 : index
    %c0_18 = arith.constant 0 : index
    %44 = vector.load %arg8[%c8, %c0_18] : memref<64x192xf32, #tpu.memory_space<vmem>>, vector<8x192xf32>
    %45 = arith.truncf %39 : vector<8x64xf32> to vector<8x64xbf16>
    %cst_19 = arith.constant dense<0.000000e+00> : vector<8x192xf32>
    %46 = tpu.matmul %45, %13, %cst_19 {dimension_numbers = #tpu.dot_dimension_numbers<[1], [0], [0], [1], [0, 0, 1, 1], [], []>} : vector<8x64xbf16>, vector<64x192xbf16>, vector<8x192xf32> -> vector<8x192xf32>
    %47 = vector.extract_strided_slice %44 {offsets = [0, 0], sizes = [8, 128], strides = [1, 1]} : vector<8x192xf32> to vector<8x128xf32>
    %48 = vector.extract_strided_slice %46 {offsets = [0, 0], sizes = [8, 128], strides = [1, 1]} : vector<8x192xf32> to vector<8x128xf32>
    %49 = arith.addf %47, %48 : vector<8x128xf32>
    %50 = arith.negf %49 : vector<8x128xf32>
    %51 = math.exp %50 : vector<8x128xf32>
    %cst_20 = arith.constant 1.000000e+00 : f32
    %52 = vector.broadcast %cst_20 : f32 to vector<8x128xf32>
    %53 = arith.addf %52, %51 : vector<8x128xf32>
    %54 = arith.divf %52, %53 : vector<8x128xf32>
    %55 = vector.extract_strided_slice %54 {offsets = [0, 0], sizes = [8, 64], strides = [1, 1]} : vector<8x128xf32> to vector<8x64xf32>
    %56 = vector.extract_strided_slice %54 {offsets = [0, 64], sizes = [8, 64], strides = [1, 1]} : vector<8x128xf32> to vector<8x64xf32>
    %57 = vector.extract_strided_slice %44 {offsets = [0, 128], sizes = [8, 64], strides = [1, 1]} : vector<8x192xf32> to vector<8x64xf32>
    %58 = vector.extract_strided_slice %46 {offsets = [0, 128], sizes = [8, 64], strides = [1, 1]} : vector<8x192xf32> to vector<8x64xf32>
    %59 = arith.addf %58, %16 : vector<8x64xf32>
    %60 = arith.mulf %55, %59 : vector<8x64xf32>
    %61 = arith.addf %57, %60 : vector<8x64xf32>
    %62 = math.tanh %61 : vector<8x64xf32>
    %63 = arith.subf %39, %62 : vector<8x64xf32>
    %64 = arith.mulf %56, %63 : vector<8x64xf32>
    %65 = arith.addf %62, %64 : vector<8x64xf32>
    %66 = vector.extract_strided_slice %65 {offsets = [0, 0], sizes = [8, 32], strides = [1, 1]} : vector<8x64xf32> to vector<8x32xf32>
    %c8_21 = arith.constant 8 : index
    %c0_22 = arith.constant 0 : index
    %67 = vector.load %arg9[%c8_21, %c0_22] : memref<64x64xf32, #tpu.memory_space<vmem>>, vector<8x32xf32>
    tpu.vector_store %arg9[%c8_21, %c0_22], %66 {strides = array<i32>} : memref<64x64xf32, #tpu.memory_space<vmem>>, vector<8x32xf32>,
    %68 = vector.extract_strided_slice %65 {offsets = [0, 32], sizes = [8, 32], strides = [1, 1]} : vector<8x64xf32> to vector<8x32xf32>
    %c48 = arith.constant 48 : index
    %c32_23 = arith.constant 32 : index
    %69 = vector.load %arg9[%c48, %c32_23] : memref<64x64xf32, #tpu.memory_space<vmem>>, vector<8x32xf32>
    tpu.vector_store %arg9[%c48, %c32_23], %68 {strides = array<i32>} : memref<64x64xf32, #tpu.memory_space<vmem>>, vector<8x32xf32>,
    %c16 = arith.constant 16 : index
    %c0_24 = arith.constant 0 : index
    %70 = vector.load %arg8[%c16, %c0_24] : memref<64x192xf32, #tpu.memory_space<vmem>>, vector<8x192xf32>
    %71 = arith.truncf %65 : vector<8x64xf32> to vector<8x64xbf16>
    %cst_25 = arith.constant dense<0.000000e+00> : vector<8x192xf32>
    %72 = tpu.matmul %71, %13, %cst_25 {dimension_numbers = #tpu.dot_dimension_numbers<[1], [0], [0], [1], [0, 0, 1, 1], [], []>} : vector<8x64xbf16>, vector<64x192xbf16>, vector<8x192xf32> -> vector<8x192xf32>
    %73 = vector.extract_strided_slice %70 {offsets = [0, 0], sizes = [8, 128], strides = [1, 1]} : vector<8x192xf32> to vector<8x128xf32>
    %74 = vector.extract_strided_slice %72 {offsets = [0, 0], sizes = [8, 128], strides = [1, 1]} : vector<8x192xf32> to vector<8x128xf32>
    %75 = arith.addf %73, %74 : vector<8x128xf32>
    %76 = arith.negf %75 : vector<8x128xf32>
    %77 = math.exp %76 : vector<8x128xf32>
    %cst_26 = arith.constant 1.000000e+00 : f32
    %78 = vector.broadcast %cst_26 : f32 to vector<8x128xf32>
    %79 = arith.addf %78, %77 : vector<8x128xf32>
    %80 = arith.divf %78, %79 : vector<8x128xf32>
    %81 = vector.extract_strided_slice %80 {offsets = [0, 0], sizes = [8, 64], strides = [1, 1]} : vector<8x128xf32> to vector<8x64xf32>
    %82 = vector.extract_strided_slice %80 {offsets = [0, 64], sizes = [8, 64], strides = [1, 1]} : vector<8x128xf32> to vector<8x64xf32>
    %83 = vector.extract_strided_slice %70 {offsets = [0, 128], sizes = [8, 64], strides = [1, 1]} : vector<8x192xf32> to vector<8x64xf32>
    %84 = vector.extract_strided_slice %72 {offsets = [0, 128], sizes = [8, 64], strides = [1, 1]} : vector<8x192xf32> to vector<8x64xf32>
    %85 = arith.addf %84, %16 : vector<8x64xf32>
    %86 = arith.mulf %81, %85 : vector<8x64xf32>
    %87 = arith.addf %83, %86 : vector<8x64xf32>
    %88 = math.tanh %87 : vector<8x64xf32>
    %89 = arith.subf %65, %88 : vector<8x64xf32>
    %90 = arith.mulf %82, %89 : vector<8x64xf32>
    %91 = arith.addf %88, %90 : vector<8x64xf32>
    %92 = vector.extract_strided_slice %91 {offsets = [0, 0], sizes = [8, 32], strides = [1, 1]} : vector<8x64xf32> to vector<8x32xf32>
    %c16_27 = arith.constant 16 : index
    %c0_28 = arith.constant 0 : index
    %93 = vector.load %arg9[%c16_27, %c0_28] : memref<64x64xf32, #tpu.memory_space<vmem>>, vector<8x32xf32>
    tpu.vector_store %arg9[%c16_27, %c0_28], %92 {strides = array<i32>} : memref<64x64xf32, #tpu.memory_space<vmem>>, vector<8x32xf32>,
    %94 = vector.extract_strided_slice %91 {offsets = [0, 32], sizes = [8, 32], strides = [1, 1]} : vector<8x64xf32> to vector<8x32xf32>
    %c40 = arith.constant 40 : index
    %c32_29 = arith.constant 32 : index
    %95 = vector.load %arg9[%c40, %c32_29] : memref<64x64xf32, #tpu.memory_space<vmem>>, vector<8x32xf32>
    tpu.vector_store %arg9[%c40, %c32_29], %94 {strides = array<i32>} : memref<64x64xf32, #tpu.memory_space<vmem>>, vector<8x32xf32>,
    %c24 = arith.constant 24 : index
    %c0_30 = arith.constant 0 : index
    %96 = vector.load %arg8[%c24, %c0_30] : memref<64x192xf32, #tpu.memory_space<vmem>>, vector<8x192xf32>
    %97 = arith.truncf %91 : vector<8x64xf32> to vector<8x64xbf16>
    %cst_31 = arith.constant dense<0.000000e+00> : vector<8x192xf32>
    %98 = tpu.matmul %97, %13, %cst_31 {dimension_numbers = #tpu.dot_dimension_numbers<[1], [0], [0], [1], [0, 0, 1, 1], [], []>} : vector<8x64xbf16>, vector<64x192xbf16>, vector<8x192xf32> -> vector<8x192xf32>
    %99 = vector.extract_strided_slice %96 {offsets = [0, 0], sizes = [8, 128], strides = [1, 1]} : vector<8x192xf32> to vector<8x128xf32>
    %100 = vector.extract_strided_slice %98 {offsets = [0, 0], sizes = [8, 128], strides = [1, 1]} : vector<8x192xf32> to vector<8x128xf32>
    %101 = arith.addf %99, %100 : vector<8x128xf32>
    %102 = arith.negf %101 : vector<8x128xf32>
    %103 = math.exp %102 : vector<8x128xf32>
    %cst_32 = arith.constant 1.000000e+00 : f32
    %104 = vector.broadcast %cst_32 : f32 to vector<8x128xf32>
    %105 = arith.addf %104, %103 : vector<8x128xf32>
    %106 = arith.divf %104, %105 : vector<8x128xf32>
    %107 = vector.extract_strided_slice %106 {offsets = [0, 0], sizes = [8, 64], strides = [1, 1]} : vector<8x128xf32> to vector<8x64xf32>
    %108 = vector.extract_strided_slice %106 {offsets = [0, 64], sizes = [8, 64], strides = [1, 1]} : vector<8x128xf32> to vector<8x64xf32>
    %109 = vector.extract_strided_slice %96 {offsets = [0, 128], sizes = [8, 64], strides = [1, 1]} : vector<8x192xf32> to vector<8x64xf32>
    %110 = vector.extract_strided_slice %98 {offsets = [0, 128], sizes = [8, 64], strides = [1, 1]} : vector<8x192xf32> to vector<8x64xf32>
    %111 = arith.addf %110, %16 : vector<8x64xf32>
    %112 = arith.mulf %107, %111 : vector<8x64xf32>
    %113 = arith.addf %109, %112 : vector<8x64xf32>
    %114 = math.tanh %113 : vector<8x64xf32>
    %115 = arith.subf %91, %114 : vector<8x64xf32>
    %116 = arith.mulf %108, %115 : vector<8x64xf32>
    %117 = arith.addf %114, %116 : vector<8x64xf32>
    %118 = vector.extract_strided_slice %117 {offsets = [0, 0], sizes = [8, 32], strides = [1, 1]} : vector<8x64xf32> to vector<8x32xf32>
    %c24_33 = arith.constant 24 : index
    %c0_34 = arith.constant 0 : index
    %119 = vector.load %arg9[%c24_33, %c0_34] : memref<64x64xf32, #tpu.memory_space<vmem>>, vector<8x32xf32>
    tpu.vector_store %arg9[%c24_33, %c0_34], %118 {strides = array<i32>} : memref<64x64xf32, #tpu.memory_space<vmem>>, vector<8x32xf32>,
    %120 = vector.extract_strided_slice %117 {offsets = [0, 32], sizes = [8, 32], strides = [1, 1]} : vector<8x64xf32> to vector<8x32xf32>
    %c32_35 = arith.constant 32 : index
    %c32_36 = arith.constant 32 : index
    %121 = vector.load %arg9[%c32_35, %c32_36] : memref<64x64xf32, #tpu.memory_space<vmem>>, vector<8x32xf32>
    tpu.vector_store %arg9[%c32_35, %c32_36], %120 {strides = array<i32>} : memref<64x64xf32, #tpu.memory_space<vmem>>, vector<8x32xf32>,
    %c32_37 = arith.constant 32 : index
    %c0_38 = arith.constant 0 : index
    %122 = vector.load %arg8[%c32_37, %c0_38] : memref<64x192xf32, #tpu.memory_space<vmem>>, vector<8x192xf32>
    %123 = arith.truncf %117 : vector<8x64xf32> to vector<8x64xbf16>
    %cst_39 = arith.constant dense<0.000000e+00> : vector<8x192xf32>
    %124 = tpu.matmul %123, %13, %cst_39 {dimension_numbers = #tpu.dot_dimension_numbers<[1], [0], [0], [1], [0, 0, 1, 1], [], []>} : vector<8x64xbf16>, vector<64x192xbf16>, vector<8x192xf32> -> vector<8x192xf32>
    %125 = vector.extract_strided_slice %122 {offsets = [0, 0], sizes = [8, 128], strides = [1, 1]} : vector<8x192xf32> to vector<8x128xf32>
    %126 = vector.extract_strided_slice %124 {offsets = [0, 0], sizes = [8, 128], strides = [1, 1]} : vector<8x192xf32> to vector<8x128xf32>
    %127 = arith.addf %125, %126 : vector<8x128xf32>
    %128 = arith.negf %127 : vector<8x128xf32>
    %129 = math.exp %128 : vector<8x128xf32>
    %cst_40 = arith.constant 1.000000e+00 : f32
    %130 = vector.broadcast %cst_40 : f32 to vector<8x128xf32>
    %131 = arith.addf %130, %129 : vector<8x128xf32>
    %132 = arith.divf %130, %131 : vector<8x128xf32>
    %133 = vector.extract_strided_slice %132 {offsets = [0, 0], sizes = [8, 64], strides = [1, 1]} : vector<8x128xf32> to vector<8x64xf32>
    %134 = vector.extract_strided_slice %132 {offsets = [0, 64], sizes = [8, 64], strides = [1, 1]} : vector<8x128xf32> to vector<8x64xf32>
    %135 = vector.extract_strided_slice %122 {offsets = [0, 128], sizes = [8, 64], strides = [1, 1]} : vector<8x192xf32> to vector<8x64xf32>
    %136 = vector.extract_strided_slice %124 {offsets = [0, 128], sizes = [8, 64], strides = [1, 1]} : vector<8x192xf32> to vector<8x64xf32>
    %137 = arith.addf %136, %16 : vector<8x64xf32>
    %138 = arith.mulf %133, %137 : vector<8x64xf32>
    %139 = arith.addf %135, %138 : vector<8x64xf32>
    %140 = math.tanh %139 : vector<8x64xf32>
    %141 = arith.subf %117, %140 : vector<8x64xf32>
    %142 = arith.mulf %134, %141 : vector<8x64xf32>
    %143 = arith.addf %140, %142 : vector<8x64xf32>
    %144 = vector.extract_strided_slice %143 {offsets = [0, 0], sizes = [8, 32], strides = [1, 1]} : vector<8x64xf32> to vector<8x32xf32>
    %c32_41 = arith.constant 32 : index
    %c0_42 = arith.constant 0 : index
    %145 = vector.load %arg9[%c32_41, %c0_42] : memref<64x64xf32, #tpu.memory_space<vmem>>, vector<8x32xf32>
    tpu.vector_store %arg9[%c32_41, %c0_42], %144 {strides = array<i32>} : memref<64x64xf32, #tpu.memory_space<vmem>>, vector<8x32xf32>,
    %146 = vector.extract_strided_slice %143 {offsets = [0, 32], sizes = [8, 32], strides = [1, 1]} : vector<8x64xf32> to vector<8x32xf32>
    %c24_43 = arith.constant 24 : index
    %c32_44 = arith.constant 32 : index
    %147 = vector.load %arg9[%c24_43, %c32_44] : memref<64x64xf32, #tpu.memory_space<vmem>>, vector<8x32xf32>
    tpu.vector_store %arg9[%c24_43, %c32_44], %146 {strides = array<i32>} : memref<64x64xf32, #tpu.memory_space<vmem>>, vector<8x32xf32>,
    %c40_45 = arith.constant 40 : index
    %c0_46 = arith.constant 0 : index
    %148 = vector.load %arg8[%c40_45, %c0_46] : memref<64x192xf32, #tpu.memory_space<vmem>>, vector<8x192xf32>
    %149 = arith.truncf %143 : vector<8x64xf32> to vector<8x64xbf16>
    %cst_47 = arith.constant dense<0.000000e+00> : vector<8x192xf32>
    %150 = tpu.matmul %149, %13, %cst_47 {dimension_numbers = #tpu.dot_dimension_numbers<[1], [0], [0], [1], [0, 0, 1, 1], [], []>} : vector<8x64xbf16>, vector<64x192xbf16>, vector<8x192xf32> -> vector<8x192xf32>
    %151 = vector.extract_strided_slice %148 {offsets = [0, 0], sizes = [8, 128], strides = [1, 1]} : vector<8x192xf32> to vector<8x128xf32>
    %152 = vector.extract_strided_slice %150 {offsets = [0, 0], sizes = [8, 128], strides = [1, 1]} : vector<8x192xf32> to vector<8x128xf32>
    %153 = arith.addf %151, %152 : vector<8x128xf32>
    %154 = arith.negf %153 : vector<8x128xf32>
    %155 = math.exp %154 : vector<8x128xf32>
    %cst_48 = arith.constant 1.000000e+00 : f32
    %156 = vector.broadcast %cst_48 : f32 to vector<8x128xf32>
    %157 = arith.addf %156, %155 : vector<8x128xf32>
    %158 = arith.divf %156, %157 : vector<8x128xf32>
    %159 = vector.extract_strided_slice %158 {offsets = [0, 0], sizes = [8, 64], strides = [1, 1]} : vector<8x128xf32> to vector<8x64xf32>
    %160 = vector.extract_strided_slice %158 {offsets = [0, 64], sizes = [8, 64], strides = [1, 1]} : vector<8x128xf32> to vector<8x64xf32>
    %161 = vector.extract_strided_slice %148 {offsets = [0, 128], sizes = [8, 64], strides = [1, 1]} : vector<8x192xf32> to vector<8x64xf32>
    %162 = vector.extract_strided_slice %150 {offsets = [0, 128], sizes = [8, 64], strides = [1, 1]} : vector<8x192xf32> to vector<8x64xf32>
    %163 = arith.addf %162, %16 : vector<8x64xf32>
    %164 = arith.mulf %159, %163 : vector<8x64xf32>
    %165 = arith.addf %161, %164 : vector<8x64xf32>
    %166 = math.tanh %165 : vector<8x64xf32>
    %167 = arith.subf %143, %166 : vector<8x64xf32>
    %168 = arith.mulf %160, %167 : vector<8x64xf32>
    %169 = arith.addf %166, %168 : vector<8x64xf32>
    %170 = vector.extract_strided_slice %169 {offsets = [0, 0], sizes = [8, 32], strides = [1, 1]} : vector<8x64xf32> to vector<8x32xf32>
    %c40_49 = arith.constant 40 : index
    %c0_50 = arith.constant 0 : index
    %171 = vector.load %arg9[%c40_49, %c0_50] : memref<64x64xf32, #tpu.memory_space<vmem>>, vector<8x32xf32>
    tpu.vector_store %arg9[%c40_49, %c0_50], %170 {strides = array<i32>} : memref<64x64xf32, #tpu.memory_space<vmem>>, vector<8x32xf32>,
    %172 = vector.extract_strided_slice %169 {offsets = [0, 32], sizes = [8, 32], strides = [1, 1]} : vector<8x64xf32> to vector<8x32xf32>
    %c16_51 = arith.constant 16 : index
    %c32_52 = arith.constant 32 : index
    %173 = vector.load %arg9[%c16_51, %c32_52] : memref<64x64xf32, #tpu.memory_space<vmem>>, vector<8x32xf32>
    tpu.vector_store %arg9[%c16_51, %c32_52], %172 {strides = array<i32>} : memref<64x64xf32, #tpu.memory_space<vmem>>, vector<8x32xf32>,
    %c48_53 = arith.constant 48 : index
    %c0_54 = arith.constant 0 : index
    %174 = vector.load %arg8[%c48_53, %c0_54] : memref<64x192xf32, #tpu.memory_space<vmem>>, vector<8x192xf32>
    %175 = arith.truncf %169 : vector<8x64xf32> to vector<8x64xbf16>
    %cst_55 = arith.constant dense<0.000000e+00> : vector<8x192xf32>
    %176 = tpu.matmul %175, %13, %cst_55 {dimension_numbers = #tpu.dot_dimension_numbers<[1], [0], [0], [1], [0, 0, 1, 1], [], []>} : vector<8x64xbf16>, vector<64x192xbf16>, vector<8x192xf32> -> vector<8x192xf32>
    %177 = vector.extract_strided_slice %174 {offsets = [0, 0], sizes = [8, 128], strides = [1, 1]} : vector<8x192xf32> to vector<8x128xf32>
    %178 = vector.extract_strided_slice %176 {offsets = [0, 0], sizes = [8, 128], strides = [1, 1]} : vector<8x192xf32> to vector<8x128xf32>
    %179 = arith.addf %177, %178 : vector<8x128xf32>
    %180 = arith.negf %179 : vector<8x128xf32>
    %181 = math.exp %180 : vector<8x128xf32>
    %cst_56 = arith.constant 1.000000e+00 : f32
    %182 = vector.broadcast %cst_56 : f32 to vector<8x128xf32>
    %183 = arith.addf %182, %181 : vector<8x128xf32>
    %184 = arith.divf %182, %183 : vector<8x128xf32>
    %185 = vector.extract_strided_slice %184 {offsets = [0, 0], sizes = [8, 64], strides = [1, 1]} : vector<8x128xf32> to vector<8x64xf32>
    %186 = vector.extract_strided_slice %184 {offsets = [0, 64], sizes = [8, 64], strides = [1, 1]} : vector<8x128xf32> to vector<8x64xf32>
    %187 = vector.extract_strided_slice %174 {offsets = [0, 128], sizes = [8, 64], strides = [1, 1]} : vector<8x192xf32> to vector<8x64xf32>
    %188 = vector.extract_strided_slice %176 {offsets = [0, 128], sizes = [8, 64], strides = [1, 1]} : vector<8x192xf32> to vector<8x64xf32>
    %189 = arith.addf %188, %16 : vector<8x64xf32>
    %190 = arith.mulf %185, %189 : vector<8x64xf32>
    %191 = arith.addf %187, %190 : vector<8x64xf32>
    %192 = math.tanh %191 : vector<8x64xf32>
    %193 = arith.subf %169, %192 : vector<8x64xf32>
    %194 = arith.mulf %186, %193 : vector<8x64xf32>
    %195 = arith.addf %192, %194 : vector<8x64xf32>
    %196 = vector.extract_strided_slice %195 {offsets = [0, 0], sizes = [8, 32], strides = [1, 1]} : vector<8x64xf32> to vector<8x32xf32>
    %c48_57 = arith.constant 48 : index
    %c0_58 = arith.constant 0 : index
    %197 = vector.load %arg9[%c48_57, %c0_58] : memref<64x64xf32, #tpu.memory_space<vmem>>, vector<8x32xf32>
    tpu.vector_store %arg9[%c48_57, %c0_58], %196 {strides = array<i32>} : memref<64x64xf32, #tpu.memory_space<vmem>>, vector<8x32xf32>,
    %198 = vector.extract_strided_slice %195 {offsets = [0, 32], sizes = [8, 32], strides = [1, 1]} : vector<8x64xf32> to vector<8x32xf32>
    %c8_59 = arith.constant 8 : index
    %c32_60 = arith.constant 32 : index
    %199 = vector.load %arg9[%c8_59, %c32_60] : memref<64x64xf32, #tpu.memory_space<vmem>>, vector<8x32xf32>
    tpu.vector_store %arg9[%c8_59, %c32_60], %198 {strides = array<i32>} : memref<64x64xf32, #tpu.memory_space<vmem>>, vector<8x32xf32>,
    %c56_61 = arith.constant 56 : index
    %c0_62 = arith.constant 0 : index
    %200 = vector.load %arg8[%c56_61, %c0_62] : memref<64x192xf32, #tpu.memory_space<vmem>>, vector<8x192xf32>
    %201 = arith.truncf %195 : vector<8x64xf32> to vector<8x64xbf16>
    %cst_63 = arith.constant dense<0.000000e+00> : vector<8x192xf32>
    %202 = tpu.matmul %201, %13, %cst_63 {dimension_numbers = #tpu.dot_dimension_numbers<[1], [0], [0], [1], [0, 0, 1, 1], [], []>} : vector<8x64xbf16>, vector<64x192xbf16>, vector<8x192xf32> -> vector<8x192xf32>
    %203 = vector.extract_strided_slice %200 {offsets = [0, 0], sizes = [8, 128], strides = [1, 1]} : vector<8x192xf32> to vector<8x128xf32>
    %204 = vector.extract_strided_slice %202 {offsets = [0, 0], sizes = [8, 128], strides = [1, 1]} : vector<8x192xf32> to vector<8x128xf32>
    %205 = arith.addf %203, %204 : vector<8x128xf32>
    %206 = arith.negf %205 : vector<8x128xf32>
    %207 = math.exp %206 : vector<8x128xf32>
    %cst_64 = arith.constant 1.000000e+00 : f32
    %208 = vector.broadcast %cst_64 : f32 to vector<8x128xf32>
    %209 = arith.addf %208, %207 : vector<8x128xf32>
    %210 = arith.divf %208, %209 : vector<8x128xf32>
    %211 = vector.extract_strided_slice %210 {offsets = [0, 0], sizes = [8, 64], strides = [1, 1]} : vector<8x128xf32> to vector<8x64xf32>
    %212 = vector.extract_strided_slice %210 {offsets = [0, 64], sizes = [8, 64], strides = [1, 1]} : vector<8x128xf32> to vector<8x64xf32>
    %213 = vector.extract_strided_slice %200 {offsets = [0, 128], sizes = [8, 64], strides = [1, 1]} : vector<8x192xf32> to vector<8x64xf32>
    %214 = vector.extract_strided_slice %202 {offsets = [0, 128], sizes = [8, 64], strides = [1, 1]} : vector<8x192xf32> to vector<8x64xf32>
    %215 = arith.addf %214, %16 : vector<8x64xf32>
    %216 = arith.mulf %211, %215 : vector<8x64xf32>
    %217 = arith.addf %213, %216 : vector<8x64xf32>
    %218 = math.tanh %217 : vector<8x64xf32>
    %219 = arith.subf %195, %218 : vector<8x64xf32>
    %220 = arith.mulf %212, %219 : vector<8x64xf32>
    %221 = arith.addf %218, %220 : vector<8x64xf32>
    %222 = vector.extract_strided_slice %221 {offsets = [0, 0], sizes = [8, 32], strides = [1, 1]} : vector<8x64xf32> to vector<8x32xf32>
    %c56_65 = arith.constant 56 : index
    %c0_66 = arith.constant 0 : index
    %223 = vector.load %arg9[%c56_65, %c0_66] : memref<64x64xf32, #tpu.memory_space<vmem>>, vector<8x32xf32>
    tpu.vector_store %arg9[%c56_65, %c0_66], %222 {strides = array<i32>} : memref<64x64xf32, #tpu.memory_space<vmem>>, vector<8x32xf32>,
    %224 = vector.extract_strided_slice %221 {offsets = [0, 32], sizes = [8, 32], strides = [1, 1]} : vector<8x64xf32> to vector<8x32xf32>
    %c0_67 = arith.constant 0 : index
    %c32_68 = arith.constant 32 : index
    %225 = vector.load %arg9[%c0_67, %c32_68] : memref<64x64xf32, #tpu.memory_space<vmem>>, vector<8x32xf32>
    tpu.vector_store %arg9[%c0_67, %c32_68], %224 {strides = array<i32>} : memref<64x64xf32, #tpu.memory_space<vmem>>, vector<8x32xf32>,
    %c0_69 = arith.constant 0 : index
    %c0_70 = arith.constant 0 : index
    %226 = vector.load %arg9[%c0_69, %c0_70] : memref<64x64xf32, #tpu.memory_space<vmem>>, vector<64x64xf32>
    %c0_71 = arith.constant 0 : index
    %c0_72 = arith.constant 0 : index
    %227 = vector.load %arg5[%c0_71, %c0_72] : memref<64x128xf32, #tpu.memory_space<vmem>>, vector<64x128xf32>
    %cst_73 = arith.constant dense<0.000000e+00> : vector<64x128xf32>
    %228 = tpu.matmul %226, %227, %cst_73 {dimension_numbers = #tpu.dot_dimension_numbers<[1], [0], [0], [1], [0, 0, 1, 1], [], []>} : vector<64x64xf32>, vector<64x128xf32>, vector<64x128xf32> -> vector<64x128xf32>
    %c0_74 = arith.constant 0 : index
    %c0_75 = arith.constant 0 : index
    %229 = vector.load %arg6[%c0_74, %c0_75] : memref<1x128xf32, #tpu.memory_space<vmem>>, vector<1x128xf32>
    %230 = vector.broadcast %229 : vector<1x128xf32> to vector<64x128xf32>
    %231 = arith.addf %228, %230 : vector<64x128xf32>
    %c0_76 = arith.constant 0 : index
    %c0_77 = arith.constant 0 : index
    %232 = vector.load %arg7[%c0_76, %c0_77] : memref<64x128xf32, #tpu.memory_space<vmem>>, vector<64x128xf32>
    tpu.vector_store %arg7[%c0_76, %c0_77], %231 {strides = array<i32>} : memref<64x128xf32, #tpu.memory_space<vmem>>, vector<64x128xf32>,
    return
  }
}

</mosaic_0001>

<llo_original>
// kernel: tpu_custom_call.1
$region0: #{tpu_custom_call.1}
  #allocation0 [shape = 'u32[]', space=smem, size = 0x4, offset = 0x4, fixed_abs, tag = 'smem constant byte address 0x4 - core index']
  #allocation1 [shape = 'u32[72,128]{1,0:T(1,128)}', space=vmem, size = 0x9000, scoped, tag = 'internal scratch']
  #allocation2 [shape = 'f32[64,192]{1,0:T(8,128)}', space=vmem, size = 0x10000, scoped, tag = 'scratch operand']
  #allocation3 [shape = 'f32[64,64]{1,0:T(8,128)}', space=vmem, size = 0x8000, scoped, tag = 'scratch operand']
  %s0 = inlined_call_operand.vmem [shape: s32[64,1], index: 0, kind: input, shape index: {}]
  %s1 = inlined_call_operand.vmem [shape: s32[64,1], index: 1, kind: input, shape index: {}]
  %s2 = inlined_call_operand.vmem [shape: f32[32,192], index: 2, kind: input, shape index: {}]
  %s3 = inlined_call_operand.vmem [shape: bf16[64,192], index: 3, kind: input, shape index: {}]
  %s4 = inlined_call_operand.vmem [shape: f32[1,64], index: 4, kind: input, shape index: {}]
  %s5 = inlined_call_operand.hbm [shape: f32[64,128], index: 5, kind: input, shape index: {}]
  %s6 = inlined_call_operand.vmem [shape: f32[1,128], index: 6, kind: input, shape index: {}]
  %s7 = inlined_call_operand.hbm [shape: f32[64,128], index: 7, kind: output, shape index: {}]
  %s8 = sld [smem:[#allocation0]]
  $region42: #{tpu_custom_call.1} parent=0
    _
  %s10 = ssub.s32 1, %s8
  %s11 = scalar_select 0, %s10, %s8
  $region1: #{tpu_custom_call.1} parent=0
    #allocation4 [shape = 'u8[32768]{0}', space=vmem, size = 0x8000, scoped, tag = 'input window, operand 5, single buffered']
    #allocation5 [shape = 's32[1]{0}', space=sflag, size = 0x4, scoped, tag = 'scoped memory for tpu_custom_call.1']
    #allocation6 [shape = 's32[1]{0}', space=sflag, size = 0x4, scoped, tag = 'scoped memory for tpu_custom_call.1']
    #allocation7 [shape = 'u8[32768]{0}', space=vmem, size = 0x8000, scoped, tag = 'output window, operand 0, single buffered']
    %12 = vsyncpa [#allocation5], 0
    %13 = vsyncpa [#allocation6], 0
    // Predicated region
    $region2: #{tpu_custom_call.1} parent=1 // pred_check
      _
    $region3: #{tpu_custom_call.1} parent=1 // pred_check_branch
      %15 = sbr.rel (0) target = $region5
    $region4: #{tpu_custom_call.1} parent=1 // pred_region
      _
    $region5: #{tpu_custom_call.1} parent=1 // pred_fallthru
      _
    // Predicated region
    $region6: #{tpu_custom_call.1} parent=1 // pred_check
      _
    $region7: #{tpu_custom_call.1} parent=1 // pred_check_branch
      %17 = sbr.rel (0) target = $region9
    $region8: #{tpu_custom_call.1} parent=1 // pred_region
      _
    $region9: #{tpu_custom_call.1} parent=1 // pred_fallthru
      _
    // Predicated region
    $region10: #{tpu_custom_call.1} parent=1 // pred_check
      _
    $region11: #{tpu_custom_call.1} parent=1 // pred_check_branch
      %19 = sbr.rel (0) target = $region13
    $region12: #{tpu_custom_call.1} parent=1 // pred_region
      _
    $region13: #{tpu_custom_call.1} parent=1 // pred_fallthru
      _
    // Predicated region
    $region14: #{tpu_custom_call.1} parent=1 // pred_check
      _
    $region15: #{tpu_custom_call.1} parent=1 // pred_check_branch
      %21 = sbr.rel (0) target = $region17
    $region16: #{tpu_custom_call.1} parent=1 // pred_region
      _
    $region17: #{tpu_custom_call.1} parent=1 // pred_fallthru
      _
    // Predicated region
    $region18: #{tpu_custom_call.1} parent=1 // pred_check
      _
    $region19: #{tpu_custom_call.1} parent=1 // pred_check_branch
      %23 = sbr.rel (0) target = $region21
    $region20: #{tpu_custom_call.1} parent=1 // pred_region
      _
    $region21: #{tpu_custom_call.1} parent=1 // pred_fallthru
      _
    // Predicated region
    $region22: #{tpu_custom_call.1} parent=1 // pred_check
      _
    $region23: #{tpu_custom_call.1} parent=1 // pred_check_branch
      %25 = sbr.rel (0) target = $region25
    $region24: #{tpu_custom_call.1} parent=1 // pred_region
      %27 = vsyncadd [#allocation5], 0
      %s28 = sshll.u32 %s5, 4
      %s29 = int_to_ptr.hbm [resolvable:$true] %s28
      %s30 = sshll.u32 [#allocation4], 4
      %s31 = int_to_ptr.vmem [resolvable:$true] %s30
      %36 = dma.hbm_to_vmem [thread:$0]  %s29, 1024, %s31, [#allocation5], 128, 128, 8
    $region25: #{tpu_custom_call.1} parent=1 // pred_fallthru
      _
    // Predicated region
    $region26: #{tpu_custom_call.1} parent=1 // pred_check
      _
    $region27: #{tpu_custom_call.1} parent=1 // pred_check_branch
      %38 = sbr.rel (0) target = $region29
    $region28: #{tpu_custom_call.1} parent=1 // pred_region
      _
    $region29: #{tpu_custom_call.1} parent=1 // pred_fallthru
      _
    // Predicated region
    $region30: #{tpu_custom_call.1} parent=1 // pred_check
      _
    $region31: #{tpu_custom_call.1} parent=1 // pred_check_branch
      %40 = sbr.rel (0) target = $region33
    $region32: #{tpu_custom_call.1} parent=1 // pred_region
      %42 = dma.done [#allocation5], 1024
    $region33: #{tpu_custom_call.1} parent=1 // pred_fallthru
      _
    %v44 = vlaneseq
    %v45 = vand.u32 %v44, 127
    %v46 = vld [vmem:[%s0] sm:$0xff]
    %v47 = vld [vmem:[%s0 + $0x8] sm:$0xff]
    %v48 = vld [vmem:[%s0 + $0x10] sm:$0xff]
    %v49 = vld [vmem:[%s0 + $0x18] sm:$0xff]
    %v50 = vld [vmem:[%s0 + $0x20] sm:$0xff]
    %v51 = vld [vmem:[%s0 + $0x28] sm:$0xff]
    %v52 = vld [vmem:[%s0 + $0x30] sm:$0xff]
    %v53 = vld [vmem:[%s0 + $0x38] sm:$0xff]
    %54 = vset.pattern.permute.xlu0 0
    %55 = vperm.xlu0 %54, %v46
    %v56 = vpop.permute.xlu0 %55
    %57 = vset.pattern.permute.xlu0 0
    %58 = vperm.xlu0 %57, %v47
    %v59 = vpop.permute.xlu0 %58
    %60 = vset.pattern.permute.xlu0 0
    %61 = vperm.xlu0 %60, %v48
    %v62 = vpop.permute.xlu0 %61
    %63 = vset.pattern.permute.xlu0 0
    %64 = vperm.xlu0 %63, %v49
    %v65 = vpop.permute.xlu0 %64
    %66 = vset.pattern.permute.xlu0 0
    %67 = vperm.xlu0 %66, %v50
    %v68 = vpop.permute.xlu0 %67
    %69 = vset.pattern.permute.xlu0 0
    %70 = vperm.xlu0 %69, %v51
    %v71 = vpop.permute.xlu0 %70
    %72 = vset.pattern.permute.xlu0 0
    %73 = vperm.xlu0 %72, %v52
    %v74 = vpop.permute.xlu0 %73
    %75 = vset.pattern.permute.xlu0 0
    %76 = vperm.xlu0 %75, %v53
    %v77 = vpop.permute.xlu0 %76
    %vm78 = vcmp.eq.s32.totalorder %v45, %v56
    %vm79 = vcmp.eq.s32.totalorder %v45, %v59
    %vm80 = vcmp.eq.s32.totalorder %v45, %v62
    %vm81 = vcmp.eq.s32.totalorder %v45, %v65
    %vm82 = vcmp.eq.s32.totalorder %v45, %v68
    %vm83 = vcmp.eq.s32.totalorder %v45, %v71
    %vm84 = vcmp.eq.s32.totalorder %v45, %v74
    %vm85 = vcmp.eq.s32.totalorder %v45, %v77
    %v86 = vld [vmem:[%s1] sm:$0xff]
    %v87 = vld [vmem:[%s1 + $0x8] sm:$0xff]
    %v88 = vld [vmem:[%s1 + $0x10] sm:$0xff]
    %v89 = vld [vmem:[%s1 + $0x18] sm:$0xff]
    %v90 = vld [vmem:[%s1 + $0x20] sm:$0xff]
    %v91 = vld [vmem:[%s1 + $0x28] sm:$0xff]
    %v92 = vld [vmem:[%s1 + $0x30] sm:$0xff]
    %v93 = vld [vmem:[%s1 + $0x38] sm:$0xff]
    %94 = vset.pattern.permute.xlu0 0
    %95 = vperm.xlu0 %94, %v86
    %v96 = vpop.permute.xlu0 %95
    %97 = vset.pattern.permute.xlu0 0
    %98 = vperm.xlu0 %97, %v87
    %v99 = vpop.permute.xlu0 %98
    %100 = vset.pattern.permute.xlu0 0
    %101 = vperm.xlu0 %100, %v88
    %v102 = vpop.permute.xlu0 %101
    %103 = vset.pattern.permute.xlu0 0
    %104 = vperm.xlu0 %103, %v89
    %v105 = vpop.permute.xlu0 %104
    %106 = vset.pattern.permute.xlu0 0
    %107 = vperm.xlu0 %106, %v90
    %v108 = vpop.permute.xlu0 %107
    %109 = vset.pattern.permute.xlu0 0
    %110 = vperm.xlu0 %109, %v91
    %v111 = vpop.permute.xlu0 %110
    %112 = vset.pattern.permute.xlu0 0
    %113 = vperm.xlu0 %112, %v92
    %v114 = vpop.permute.xlu0 %113
    %115 = vset.pattern.permute.xlu0 0
    %116 = vperm.xlu0 %115, %v93
    %v117 = vpop.permute.xlu0 %116
    %vm118 = vcmp.eq.s32.totalorder %v45, %v96
    %vm119 = vcmp.eq.s32.totalorder %v45, %v99
    %vm120 = vcmp.eq.s32.totalorder %v45, %v102
    %vm121 = vcmp.eq.s32.totalorder %v45, %v105
    %vm122 = vcmp.eq.s32.totalorder %v45, %v108
    %vm123 = vcmp.eq.s32.totalorder %v45, %v111
    %vm124 = vcmp.eq.s32.totalorder %v45, %v114
    %vm125 = vcmp.eq.s32.totalorder %v45, %v117
    %vm126 = vmor %vm78, %vm118
    %vm127 = vmor %vm79, %vm119
    %vm128 = vmor %vm80, %vm120
    %vm129 = vmor %vm81, %vm121
    %vm130 = vmor %vm82, %vm122
    %vm131 = vmor %vm83, %vm123
    %vm132 = vmor %vm84, %vm124
    %vm133 = vmor %vm85, %vm125
    %v134 = vsel %vm126, 1, 0
    %v135 = vsel %vm127, 1, 0
    %v136 = vsel %vm128, 1, 0
    %v137 = vsel %vm129, 1, 0
    %v138 = vsel %vm130, 1, 0
    %v139 = vsel %vm131, 1, 0
    %v140 = vsel %vm132, 1, 0
    %v141 = vsel %vm133, 1, 0
    %v142 = vcvt.s32.f32 %v134
    %v143 = vcvt.s32.f32 %v135
    %v144 = vcvt.s32.f32 %v136
    %v145 = vcvt.s32.f32 %v137
    %v146 = vcvt.s32.f32 %v138
    %v147 = vcvt.s32.f32 %v139
    %v148 = vcvt.s32.f32 %v140
    %v149 = vcvt.s32.f32 %v141
    %v150 = vld [vmem:[%s2] sm:$0xff]
    %v151 = vld [vmem:[%s2 + $0x8] sm:$0xff]
    %v152 = vld [vmem:[%s2 + $0x10] sm:$0xff]
    %v153 = vld [vmem:[%s2 + $0x18] sm:$0xff]
    %v154 = vld [vmem:[%s2 + $0x20] sm:$0xff]
    %v155 = vld [vmem:[%s2 + $0x28] sm:$0xff]
    %v156 = vld [vmem:[%s2 + $0x30] sm:$0xff]
    %v157 = vld [vmem:[%s2 + $0x38] sm:$0xff]
    %vm158 = vcmask 261120
    %v160 = vsel %vm158, %v142, 0
    %v163 = vsel %vm158, %v143, 0
    %v166 = vsel %vm158, %v144, 0
    %v169 = vsel %vm158, %v145, 0
    %v172 = vsel %vm158, %v146, 0
    %v175 = vsel %vm158, %v147, 0
    %v178 = vsel %vm158, %v148, 0
    %v181 = vsel %vm158, %v149, 0
    %183 = vmatpush.msra.mxu0 0.0
    %184 = vmatpush.msra.mxu0 0.0
    %185 = vmatpush.msra.mxu0 0.0
    %186 = vmatpush.msra.mxu0 0.0
    %187 = vmatpush.msra.mxu0 0.0
    %188 = vmatpush.msra.mxu0 0.0
    %189 = vmatpush.msra.mxu0 0.0
    %190 = vmatpush.msra.mxu0 0.0
    %191 = vmatpush.msra.mxu0 0.0
    %192 = vmatpush.msra.mxu0 0.0
    %193 = vmatpush.msra.mxu0 0.0
    %194 = vmatpush.msra.mxu0 0.0
    %195 = vmatpush.msra.mxu0 %v156
    %196 = vmatpush.msra.mxu0 %v154
    %197 = vmatpush.msra.mxu0 %v152
    %198 = vmatpush.msra.mxu0 %v150
    %199 = vmatmul.f32.gmra.mxu0 %v160
    %v200 = vpop.f32.mrf.mxu0
    %v201 = vadd.f32 0.0, %v200
    %202 = vmatmul.f32.gmra.mxu0 %v163
    %v203 = vpop.f32.mrf.mxu0
    %v204 = vadd.f32 0.0, %v203
    %205 = vmatmul.f32.gmra.mxu0 %v166
    %v206 = vpop.f32.mrf.mxu0
    %v207 = vadd.f32 0.0, %v206
    %208 = vmatmul.f32.gmra.mxu0 %v169
    %v209 = vpop.f32.mrf.mxu0
    %v210 = vadd.f32 0.0, %v209
    %211 = vmatmul.f32.gmra.mxu0 %v172
    %v212 = vpop.f32.mrf.mxu0
    %v213 = vadd.f32 0.0, %v212
    %214 = vmatmul.f32.gmra.mxu0 %v175
    %v215 = vpop.f32.mrf.mxu0
    %v216 = vadd.f32 0.0, %v215
    %217 = vmatmul.f32.gmra.mxu0 %v178
    %v218 = vpop.f32.mrf.mxu0
    %v219 = vadd.f32 0.0, %v218
    %220 = vmatmul.f32.gmra.mxu0 %v181
    %v221 = vpop.f32.mrf.mxu0
    %v222 = vadd.f32 0.0, %v221
    %223 = vdwg.mxu0
    %224 = vmatpush.msra.mxu0 0.0
    %225 = vmatpush.msra.mxu0 0.0
    %226 = vmatpush.msra.mxu0 0.0
    %227 = vmatpush.msra.mxu0 0.0
    %228 = vmatpush.msra.mxu0 0.0
    %229 = vmatpush.msra.mxu0 0.0
    %230 = vmatpush.msra.mxu0 0.0
    %231 = vmatpush.msra.mxu0 0.0
    %232 = vmatpush.msra.mxu0 0.0
    %233 = vmatpush.msra.mxu0 0.0
    %234 = vmatpush.msra.mxu0 0.0
    %235 = vmatpush.msra.mxu0 0.0
    %236 = vmatpush.msra.mxu0 %v157
    %237 = vmatpush.msra.mxu0 %v155
    %238 = vmatpush.msra.mxu0 %v153
    %239 = vmatpush.msra.mxu0 %v151
    %240 = vmatmul.f32.gmra.mxu0 %v160
    %v241 = vpop.f32.mrf.mxu0
    %v242 = vadd.f32 0.0, %v241
    %243 = vmatmul.f32.gmra.mxu0 %v163
    %v244 = vpop.f32.mrf.mxu0
    %v245 = vadd.f32 0.0, %v244
    %246 = vmatmul.f32.gmra.mxu0 %v166
    %v247 = vpop.f32.mrf.mxu0
    %v248 = vadd.f32 0.0, %v247
    %249 = vmatmul.f32.gmra.mxu0 %v169
    %v250 = vpop.f32.mrf.mxu0
    %v251 = vadd.f32 0.0, %v250
    %252 = vmatmul.f32.gmra.mxu0 %v172
    %v253 = vpop.f32.mrf.mxu0
    %v254 = vadd.f32 0.0, %v253
    %255 = vmatmul.f32.gmra.mxu0 %v175
    %v256 = vpop.f32.mrf.mxu0
    %v257 = vadd.f32 0.0, %v256
    %258 = vmatmul.f32.gmra.mxu0 %v178
    %v259 = vpop.f32.mrf.mxu0
    %v260 = vadd.f32 0.0, %v259
    %261 = vmatmul.f32.gmra.mxu0 %v181
    %v262 = vpop.f32.mrf.mxu0
    %v263 = vadd.f32 0.0, %v262
    %264 = vdwg.mxu0
    %265 = vst [vmem:[#allocation2] sm:$0xff] %v201
    %vm266 = vcmask 523264
    %267 = vst.msk [vmem:[#allocation2 + $0x8] sm:$0xff] %vm266, %v242
    %268 = vst [vmem:[#allocation2 + $0x10] sm:$0xff] %v204
    %269 = vst.msk [vmem:[#allocation2 + $0x18] sm:$0xff] %vm266, %v245
    %270 = vst [vmem:[#allocation2 + $0x20] sm:$0xff] %v207
    %271 = vst.msk [vmem:[#allocation2 + $0x28] sm:$0xff] %vm266, %v248
    %272 = vst [vmem:[#allocation2 + $0x30] sm:$0xff] %v210
    %273 = vst.msk [vmem:[#allocation2 + $0x38] sm:$0xff] %vm266, %v251
    %274 = vst [vmem:[#allocation2 + $0x40] sm:$0xff] %v213
    %275 = vst.msk [vmem:[#allocation2 + $0x48] sm:$0xff] %vm266, %v254
    %276 = vst [vmem:[#allocation2 + $0x50] sm:$0xff] %v216
    %277 = vst.msk [vmem:[#allocation2 + $0x58] sm:$0xff] %vm266, %v257
    %278 = vst [vmem:[#allocation2 + $0x60] sm:$0xff] %v219
    %279 = vst.msk [vmem:[#allocation2 + $0x68] sm:$0xff] %vm266, %v260
    %280 = vst [vmem:[#allocation2 + $0x70] sm:$0xff] %v222
    %281 = vst.msk [vmem:[#allocation2 + $0x78] sm:$0xff] %vm266, %v263
    %v282 = vld [vmem:[%s3] sm:$0xff]
    %v283 = vld [vmem:[%s3 + $0x8] sm:$0xff]
    %v284 = vld [vmem:[%s3 + $0x10] sm:$0xff]
    %v285 = vld [vmem:[%s3 + $0x18] sm:$0xff]
    %v286 = vld [vmem:[%s3 + $0x20] sm:$0xff]
    %v287 = vld [vmem:[%s3 + $0x28] sm:$0xff]
    %v288 = vld [vmem:[%s3 + $0x30] sm:$0xff]
    %v289 = vld [vmem:[%s3 + $0x38] sm:$0xff]
    %v290 = vld [vmem:[%s4] sm:$0x1]
    %v292 = vperm.slane %v290, 0
    %v294 = vld [vmem:[#allocation2] sm:$0xff]
    %v295 = vld [vmem:[#allocation2 + $0x8] sm:$0xff]
    %v304 = vunpack.c.l.b16 %v282
    %v305 = vunpack.c.h.b16 %v282
    %v306 = vunpack.c.l.b16 %v283
    %v307 = vunpack.c.h.b16 %v283
    %v308 = vunpack.c.l.b16 %v284
    %v309 = vunpack.c.h.b16 %v284
    %v310 = vunpack.c.l.b16 %v285
    %v311 = vunpack.c.h.b16 %v285
    %v312 = vunpack.c.l.b16 %v286
    %v313 = vunpack.c.h.b16 %v286
    %v314 = vunpack.c.l.b16 %v287
    %v315 = vunpack.c.h.b16 %v287
    %v316 = vunpack.c.l.b16 %v288
    %v317 = vunpack.c.h.b16 %v288
    %v318 = vunpack.c.l.b16 %v289
    %v319 = vunpack.c.h.b16 %v289
    %v320 = vpack.c.b16 %v306, %v304
    %v321 = vpack.c.b16 %v307, %v305
    %v322 = vpack.c.b16 %v310, %v308
    %v323 = vpack.c.b16 %v311, %v309
    %v324 = vpack.c.b16 %v314, %v312
    %v325 = vpack.c.b16 %v315, %v313
    %v326 = vpack.c.b16 %v318, %v316
    %v327 = vpack.c.b16 %v319, %v317
    %v337 = vsel %vm266, 0, 0
    %339 = vmatpush.bf16.msra.mxu0 0
    %340 = vmatpush.bf16.msra.mxu0 0
    %341 = vmatpush.bf16.msra.mxu0 0
    %342 = vmatpush.bf16.msra.mxu0 0
    %343 = vmatpush.bf16.msra.mxu0 %v326
    %344 = vmatpush.bf16.msra.mxu0 %v324
    %345 = vmatpush.bf16.msra.mxu0 %v322
    %346 = vmatpush.bf16.msra.mxu0 %v320
    %347 = vmatmul.bf16.gmra.mxu0 %v337
    %v348 = vpop.f32.mrf.mxu0
    %v349 = vadd.f32 0.0, %v348
    %v350 = vpop.f32.mrf.mxu0
    %351 = vdwg.mxu0
    %352 = vmatpush.bf16.msra.mxu0 0
    %353 = vmatpush.bf16.msra.mxu0 0
    %354 = vmatpush.bf16.msra.mxu0 0
    %355 = vmatpush.bf16.msra.mxu0 0
    %356 = vmatpush.bf16.msra.mxu0 %v327
    %357 = vmatpush.bf16.msra.mxu0 %v325
    %358 = vmatpush.bf16.msra.mxu0 %v323
    %359 = vmatpush.bf16.msra.mxu0 %v321
    %360 = vmatmul.bf16.gmra.mxu0 %v337
    %v361 = vpop.f32.mrf.mxu0
    %v362 = vadd.f32 0.0, %v361
    %v363 = vpop.f32.mrf.mxu0
    %364 = vdwg.mxu0
    %v365 = vadd.f32 %v294, %v349
    %v366 = vxor.u32 %v365, 2147483648
    %v367 = vmul.f32 %v366, 1.442695
    %v368 = vpow.pop %v367
    %v369 = vadd.f32 %v368, 1.0
    %v370 = vrcp.pop %v369
    %v371 = vmul.f32 %v369, %v370
    %v372 = vsub.f32 1.0, %v371
    %v373 = vmul.f32 %v370, %v372
    %v374 = vadd.f32 %v370, %v373
    %vm375 = vweird.f32 %v369
    %vm376 = vweird.f32 %v370
    %vm377 = vmor %vm375, %vm376
    %v378 = vsel %vm377, %v370, %v374
    %v379 = vand.u32 2147483647, %v369
    %vm380 = vcmp.eq.f32.partialorder %v379, 8.507059e+37
    %v381 = vand.u32 %v369, 2147483648
    %v382 = vor.u32 1.1754944e-38, %v381
    %v383 = vsel %vm380, %v382, %v378
    %v384 = vmul.f32 1.0, %v383
    %v385 = vadd.f32 %v362, %v292
    %v386 = vmul.f32 %v384, %v385
    %v387 = vadd.f32 %v295, %v386
    %v388 = vtanh.pop %v387
    %v389 = vsub.f32 0.0, %v388
    %391 = vrot.lane.b32.xlu0 %v389, 64
    %v392 = vpop.permute.xlu0 %391
    %v394 = vmul.f32 %v384, %v392
    %396 = vrot.lane.b32.xlu0 %v394, 64
    %v397 = vpop.permute.xlu0 %396
    %v399 = vadd.f32 %v388, %v397
    %400 = vst.msk [vmem:[#allocation3] sm:$0xff] %vm158, %v399
    %vm401 = vcmask 523520
    %402 = vst.msk [vmem:[#allocation3 + $0x38] sm:$0xff] %vm401, %v399
    %v403 = vld [vmem:[#allocation2 + $0x10] sm:$0xff]
    %v404 = vld [vmem:[#allocation2 + $0x18] sm:$0xff]
    %v405 = vpack.c.bf16 %v399, %v399
    %v407 = vsel %vm266, %v405, 0
    %409 = vmatpush.bf16.msra.mxu0 0
    %410 = vmatpush.bf16.msra.mxu0 0
    %411 = vmatpush.bf16.msra.mxu0 0
    %412 = vmatpush.bf16.msra.mxu0 0
    %413 = vmatpush.bf16.msra.mxu0 %v326
    %414 = vmatpush.bf16.msra.mxu0 %v324
    %415 = vmatpush.bf16.msra.mxu0 %v322
    %416 = vmatpush.bf16.msra.mxu0 %v320
    %417 = vmatmul.bf16.gmra.mxu0 %v407
    %v418 = vpop.f32.mrf.mxu0
    %v419 = vadd.f32 0.0, %v418
    %v420 = vpop.f32.mrf.mxu0
    %421 = vdwg.mxu0
    %422 = vmatpush.bf16.msra.mxu0 0
    %423 = vmatpush.bf16.msra.mxu0 0
    %424 = vmatpush.bf16.msra.mxu0 0
    %425 = vmatpush.bf16.msra.mxu0 0
    %426 = vmatpush.bf16.msra.mxu0 %v327
    %427 = vmatpush.bf16.msra.mxu0 %v325
    %428 = vmatpush.bf16.msra.mxu0 %v323
    %429 = vmatpush.bf16.msra.mxu0 %v321
    %430 = vmatmul.bf16.gmra.mxu0 %v407
    %v431 = vpop.f32.mrf.mxu0
    %v432 = vadd.f32 0.0, %v431
    %v433 = vpop.f32.mrf.mxu0
    %434 = vdwg.mxu0
    %v435 = vadd.f32 %v403, %v419
    %v436 = vxor.u32 %v435, 2147483648
    %v437 = vmul.f32 %v436, 1.442695
    %v438 = vpow.pop %v437
    %v439 = vadd.f32 %v438, 1.0
    %v440 = vrcp.pop %v439
    %v441 = vmul.f32 %v439, %v440
    %v442 = vsub.f32 1.0, %v441
    %v443 = vmul.f32 %v440, %v442
    %v444 = vadd.f32 %v440, %v443
    %vm445 = vweird.f32 %v439
    %vm446 = vweird.f32 %v440
    %vm447 = vmor %vm445, %vm446
    %v448 = vsel %vm447, %v440, %v444
    %v449 = vand.u32 2147483647, %v439
    %vm450 = vcmp.eq.f32.partialorder %v449, 8.507059e+37
    %v451 = vand.u32 %v439, 2147483648
    %v452 = vor.u32 1.1754944e-38, %v451
    %v453 = vsel %vm450, %v452, %v448
    %v454 = vmul.f32 1.0, %v453
    %v455 = vadd.f32 %v432, %v292
    %v456 = vmul.f32 %v454, %v455
    %v457 = vadd.f32 %v404, %v456
    %v458 = vtanh.pop %v457
    %v459 = vsub.f32 %v399, %v458
    %461 = vrot.lane.b32.xlu0 %v459, 64
    %v462 = vpop.permute.xlu0 %461
    %v464 = vmul.f32 %v454, %v462
    %466 = vrot.lane.b32.xlu0 %v464, 64
    %v467 = vpop.permute.xlu0 %466
    %v469 = vadd.f32 %v458, %v467
    %470 = vst.msk [vmem:[#allocation3 + $0x8] sm:$0xff] %vm158, %v469
    %471 = vst.msk [vmem:[#allocation3 + $0x30] sm:$0xff] %vm401, %v469
    %v472 = vld [vmem:[#allocation2 + $0x20] sm:$0xff]
    %v473 = vld [vmem:[#allocation2 + $0x28] sm:$0xff]
    %v474 = vpack.c.bf16 %v469, %v469
    %v476 = vsel %vm266, %v474, 0
    %478 = vmatpush.bf16.msra.mxu0 0
    %479 = vmatpush.bf16.msra.mxu0 0
    %480 = vmatpush.bf16.msra.mxu0 0
    %481 = vmatpush.bf16.msra.mxu0 0
    %482 = vmatpush.bf16.msra.mxu0 %v326
    %483 = vmatpush.bf16.msra.mxu0 %v324
    %484 = vmatpush.bf16.msra.mxu0 %v322
    %485 = vmatpush.bf16.msra.mxu0 %v320
    %486 = vmatmul.bf16.gmra.mxu0 %v476
    %v487 = vpop.f32.mrf.mxu0
    %v488 = vadd.f32 0.0, %v487
    %v489 = vpop.f32.mrf.mxu0
    %490 = vdwg.mxu0
    %491 = vmatpush.bf16.msra.mxu0 0
    %492 = vmatpush.bf16.msra.mxu0 0
    %493 = vmatpush.bf16.msra.mxu0 0
    %494 = vmatpush.bf16.msra.mxu0 0
    %495 = vmatpush.bf16.msra.mxu0 %v327
    %496 = vmatpush.bf16.msra.mxu0 %v325
    %497 = vmatpush.bf16.msra.mxu0 %v323
    %498 = vmatpush.bf16.msra.mxu0 %v321
    %499 = vmatmul.bf16.gmra.mxu0 %v476
    %v500 = vpop.f32.mrf.mxu0
    %v501 = vadd.f32 0.0, %v500
    %v502 = vpop.f32.mrf.mxu0
    %503 = vdwg.mxu0
    %v504 = vadd.f32 %v472, %v488
    %v505 = vxor.u32 %v504, 2147483648
    %v506 = vmul.f32 %v505, 1.442695
    %v507 = vpow.pop %v506
    %v508 = vadd.f32 %v507, 1.0
    %v509 = vrcp.pop %v508
    %v510 = vmul.f32 %v508, %v509
    %v511 = vsub.f32 1.0, %v510
    %v512 = vmul.f32 %v509, %v511
    %v513 = vadd.f32 %v509, %v512
    %vm514 = vweird.f32 %v508
    %vm515 = vweird.f32 %v509
    %vm516 = vmor %vm514, %vm515
    %v517 = vsel %vm516, %v509, %v513
    %v518 = vand.u32 2147483647, %v508
    %vm519 = vcmp.eq.f32.partialorder %v518, 8.507059e+37
    %v520 = vand.u32 %v508, 2147483648
    %v521 = vor.u32 1.1754944e-38, %v520
    %v522 = vsel %vm519, %v521, %v517
    %v523 = vmul.f32 1.0, %v522
    %v524 = vadd.f32 %v501, %v292
    %v525 = vmul.f32 %v523, %v524
    %v526 = vadd.f32 %v473, %v525
    %v527 = vtanh.pop %v526
    %v528 = vsub.f32 %v469, %v527
    %530 = vrot.lane.b32.xlu0 %v528, 64
    %v531 = vpop.permute.xlu0 %530
    %v533 = vmul.f32 %v523, %v531
    %535 = vrot.lane.b32.xlu0 %v533, 64
    %v536 = vpop.permute.xlu0 %535
    %v538 = vadd.f32 %v527, %v536
    %539 = vst.msk [vmem:[#allocation3 + $0x10] sm:$0xff] %vm158, %v538
    %540 = vst.msk [vmem:[#allocation3 + $0x28] sm:$0xff] %vm401, %v538
    %v541 = vld [vmem:[#allocation2 + $0x30] sm:$0xff]
    %v542 = vld [vmem:[#allocation2 + $0x38] sm:$0xff]
    %v543 = vpack.c.bf16 %v538, %v538
    %v545 = vsel %vm266, %v543, 0
    %547 = vmatpush.bf16.msra.mxu0 0
    %548 = vmatpush.bf16.msra.mxu0 0
    %549 = vmatpush.bf16.msra.mxu0 0
    %550 = vmatpush.bf16.msra.mxu0 0
    %551 = vmatpush.bf16.msra.mxu0 %v326
    %552 = vmatpush.bf16.msra.mxu0 %v324
    %553 = vmatpush.bf16.msra.mxu0 %v322
    %554 = vmatpush.bf16.msra.mxu0 %v320
    %555 = vmatmul.bf16.gmra.mxu0 %v545
    %v556 = vpop.f32.mrf.mxu0
    %v557 = vadd.f32 0.0, %v556
    %v558 = vpop.f32.mrf.mxu0
    %559 = vdwg.mxu0
    %560 = vmatpush.bf16.msra.mxu0 0
    %561 = vmatpush.bf16.msra.mxu0 0
    %562 = vmatpush.bf16.msra.mxu0 0
    %563 = vmatpush.bf16.msra.mxu0 0
    %564 = vmatpush.bf16.msra.mxu0 %v327
    %565 = vmatpush.bf16.msra.mxu0 %v325
    %566 = vmatpush.bf16.msra.mxu0 %v323
    %567 = vmatpush.bf16.msra.mxu0 %v321
    %568 = vmatmul.bf16.gmra.mxu0 %v545
    %v569 = vpop.f32.mrf.mxu0
    %v570 = vadd.f32 0.0, %v569
    %v571 = vpop.f32.mrf.mxu0
    %572 = vdwg.mxu0
    %v573 = vadd.f32 %v541, %v557
    %v574 = vxor.u32 %v573, 2147483648
    %v575 = vmul.f32 %v574, 1.442695
    %v576 = vpow.pop %v575
    %v577 = vadd.f32 %v576, 1.0
    %v578 = vrcp.pop %v577
    %v579 = vmul.f32 %v577, %v578
    %v580 = vsub.f32 1.0, %v579
    %v581 = vmul.f32 %v578, %v580
    %v582 = vadd.f32 %v578, %v581
    %vm583 = vweird.f32 %v577
    %vm584 = vweird.f32 %v578
    %vm585 = vmor %vm583, %vm584
    %v586 = vsel %vm585, %v578, %v582
    %v587 = vand.u32 2147483647, %v577
    %vm588 = vcmp.eq.f32.partialorder %v587, 8.507059e+37
    %v589 = vand.u32 %v577, 2147483648
    %v590 = vor.u32 1.1754944e-38, %v589
    %v591 = vsel %vm588, %v590, %v586
    %v592 = vmul.f32 1.0, %v591
    %v593 = vadd.f32 %v570, %v292
    %v594 = vmul.f32 %v592, %v593
    %v595 = vadd.f32 %v542, %v594
    %v596 = vtanh.pop %v595
    %v597 = vsub.f32 %v538, %v596
    %599 = vrot.lane.b32.xlu0 %v597, 64
    %v600 = vpop.permute.xlu0 %599
    %v602 = vmul.f32 %v592, %v600
    %604 = vrot.lane.b32.xlu0 %v602, 64
    %v605 = vpop.permute.xlu0 %604
    %v607 = vadd.f32 %v596, %v605
    %608 = vst.msk [vmem:[#allocation3 + $0x18] sm:$0xff] %vm158, %v607
    %609 = vst.msk [vmem:[#allocation3 + $0x20] sm:$0xff] %vm401, %v607
    %v610 = vld [vmem:[#allocation2 + $0x40] sm:$0xff]
    %v611 = vld [vmem:[#allocation2 + $0x48] sm:$0xff]
    %v612 = vpack.c.bf16 %v607, %v607
    %v614 = vsel %vm266, %v612, 0
    %616 = vmatpush.bf16.msra.mxu0 0
    %617 = vmatpush.bf16.msra.mxu0 0
    %618 = vmatpush.bf16.msra.mxu0 0
    %619 = vmatpush.bf16.msra.mxu0 0
    %620 = vmatpush.bf16.msra.mxu0 %v326
    %621 = vmatpush.bf16.msra.mxu0 %v324
    %622 = vmatpush.bf16.msra.mxu0 %v322
    %623 = vmatpush.bf16.msra.mxu0 %v320
    %624 = vmatmul.bf16.gmra.mxu0 %v614
    %v625 = vpop.f32.mrf.mxu0
    %v626 = vadd.f32 0.0, %v625
    %v627 = vpop.f32.mrf.mxu0
    %628 = vdwg.mxu0
    %629 = vmatpush.bf16.msra.mxu0 0
    %630 = vmatpush.bf16.msra.mxu0 0
    %631 = vmatpush.bf16.msra.mxu0 0
    %632 = vmatpush.bf16.msra.mxu0 0
    %633 = vmatpush.bf16.msra.mxu0 %v327
    %634 = vmatpush.bf16.msra.mxu0 %v325
    %635 = vmatpush.bf16.msra.mxu0 %v323
    %636 = vmatpush.bf16.msra.mxu0 %v321
    %637 = vmatmul.bf16.gmra.mxu0 %v614
    %v638 = vpop.f32.mrf.mxu0
    %v639 = vadd.f32 0.0, %v638
    %v640 = vpop.f32.mrf.mxu0
    %641 = vdwg.mxu0
    %v642 = vadd.f32 %v610, %v626
    %v643 = vxor.u32 %v642, 2147483648
    %v644 = vmul.f32 %v643, 1.442695
    %v645 = vpow.pop %v644
    %v646 = vadd.f32 %v645, 1.0
    %v647 = vrcp.pop %v646
    %v648 = vmul.f32 %v646, %v647
    %v649 = vsub.f32 1.0, %v648
    %v650 = vmul.f32 %v647, %v649
    %v651 = vadd.f32 %v647, %v650
    %vm652 = vweird.f32 %v646
    %vm653 = vweird.f32 %v647
    %vm654 = vmor %vm652, %vm653
    %v655 = vsel %vm654, %v647, %v651
    %v656 = vand.u32 2147483647, %v646
    %vm657 = vcmp.eq.f32.partialorder %v656, 8.507059e+37
    %v658 = vand.u32 %v646, 2147483648
    %v659 = vor.u32 1.1754944e-38, %v658
    %v660 = vsel %vm657, %v659, %v655
    %v661 = vmul.f32 1.0, %v660
    %v662 = vadd.f32 %v639, %v292
    %v663 = vmul.f32 %v661, %v662
    %v664 = vadd.f32 %v611, %v663
    %v665 = vtanh.pop %v664
    %v666 = vsub.f32 %v607, %v665
    %668 = vrot.lane.b32.xlu0 %v666, 64
    %v669 = vpop.permute.xlu0 %668
    %v671 = vmul.f32 %v661, %v669
    %673 = vrot.lane.b32.xlu0 %v671, 64
    %v674 = vpop.permute.xlu0 %673
    %v676 = vadd.f32 %v665, %v674
    %677 = vst.msk [vmem:[#allocation3 + $0x20] sm:$0xff] %vm158, %v676
    %678 = vst.msk [vmem:[#allocation3 + $0x18] sm:$0xff] %vm401, %v676
    %v679 = vld [vmem:[#allocation2 + $0x50] sm:$0xff]
    %v680 = vld [vmem:[#allocation2 + $0x58] sm:$0xff]
    %v681 = vpack.c.bf16 %v676, %v676
    %v683 = vsel %vm266, %v681, 0
    %685 = vmatpush.bf16.msra.mxu0 0
    %686 = vmatpush.bf16.msra.mxu0 0
    %687 = vmatpush.bf16.msra.mxu0 0
    %688 = vmatpush.bf16.msra.mxu0 0
    %689 = vmatpush.bf16.msra.mxu0 %v326
    %690 = vmatpush.bf16.msra.mxu0 %v324
    %691 = vmatpush.bf16.msra.mxu0 %v322
    %692 = vmatpush.bf16.msra.mxu0 %v320
    %693 = vmatmul.bf16.gmra.mxu0 %v683
    %v694 = vpop.f32.mrf.mxu0
    %v695 = vadd.f32 0.0, %v694
    %v696 = vpop.f32.mrf.mxu0
    %697 = vdwg.mxu0
    %698 = vmatpush.bf16.msra.mxu0 0
    %699 = vmatpush.bf16.msra.mxu0 0
    %700 = vmatpush.bf16.msra.mxu0 0
    %701 = vmatpush.bf16.msra.mxu0 0
    %702 = vmatpush.bf16.msra.mxu0 %v327
    %703 = vmatpush.bf16.msra.mxu0 %v325
    %704 = vmatpush.bf16.msra.mxu0 %v323
    %705 = vmatpush.bf16.msra.mxu0 %v321
    %706 = vmatmul.bf16.gmra.mxu0 %v683
    %v707 = vpop.f32.mrf.mxu0
    %v708 = vadd.f32 0.0, %v707
    %v709 = vpop.f32.mrf.mxu0
    %710 = vdwg.mxu0
    %v711 = vadd.f32 %v679, %v695
    %v712 = vxor.u32 %v711, 2147483648
    %v713 = vmul.f32 %v712, 1.442695
    %v714 = vpow.pop %v713
    %v715 = vadd.f32 %v714, 1.0
    %v716 = vrcp.pop %v715
    %v717 = vmul.f32 %v715, %v716
    %v718 = vsub.f32 1.0, %v717
    %v719 = vmul.f32 %v716, %v718
    %v720 = vadd.f32 %v716, %v719
    %vm721 = vweird.f32 %v715
    %vm722 = vweird.f32 %v716
    %vm723 = vmor %vm721, %vm722
    %v724 = vsel %vm723, %v716, %v720
    %v725 = vand.u32 2147483647, %v715
    %vm726 = vcmp.eq.f32.partialorder %v725, 8.507059e+37
    %v727 = vand.u32 %v715, 2147483648
    %v728 = vor.u32 1.1754944e-38, %v727
    %v729 = vsel %vm726, %v728, %v724
    %v730 = vmul.f32 1.0, %v729
    %v731 = vadd.f32 %v708, %v292
    %v732 = vmul.f32 %v730, %v731
    %v733 = vadd.f32 %v680, %v732
    %v734 = vtanh.pop %v733
    %v735 = vsub.f32 %v676, %v734
    %737 = vrot.lane.b32.xlu0 %v735, 64
    %v738 = vpop.permute.xlu0 %737
    %v740 = vmul.f32 %v730, %v738
    %742 = vrot.lane.b32.xlu0 %v740, 64
    %v743 = vpop.permute.xlu0 %742
    %v745 = vadd.f32 %v734, %v743
    %746 = vst.msk [vmem:[#allocation3 + $0x28] sm:$0xff] %vm158, %v745
    %747 = vst.msk [vmem:[#allocation3 + $0x10] sm:$0xff] %vm401, %v745
    %v748 = vld [vmem:[#allocation2 + $0x60] sm:$0xff]
    %v749 = vld [vmem:[#allocation2 + $0x68] sm:$0xff]
    %v750 = vpack.c.bf16 %v745, %v745
    %v752 = vsel %vm266, %v750, 0
    %754 = vmatpush.bf16.msra.mxu0 0
    %755 = vmatpush.bf16.msra.mxu0 0
    %756 = vmatpush.bf16.msra.mxu0 0
    %757 = vmatpush.bf16.msra.mxu0 0
    %758 = vmatpush.bf16.msra.mxu0 %v326
    %759 = vmatpush.bf16.msra.mxu0 %v324
    %760 = vmatpush.bf16.msra.mxu0 %v322
    %761 = vmatpush.bf16.msra.mxu0 %v320
    %762 = vmatmul.bf16.gmra.mxu0 %v752
    %v763 = vpop.f32.mrf.mxu0
    %v764 = vadd.f32 0.0, %v763
    %v765 = vpop.f32.mrf.mxu0
    %766 = vdwg.mxu0
    %767 = vmatpush.bf16.msra.mxu0 0
    %768 = vmatpush.bf16.msra.mxu0 0
    %769 = vmatpush.bf16.msra.mxu0 0
    %770 = vmatpush.bf16.msra.mxu0 0
    %771 = vmatpush.bf16.msra.mxu0 %v327
    %772 = vmatpush.bf16.msra.mxu0 %v325
    %773 = vmatpush.bf16.msra.mxu0 %v323
    %774 = vmatpush.bf16.msra.mxu0 %v321
    %775 = vmatmul.bf16.gmra.mxu0 %v752
    %v776 = vpop.f32.mrf.mxu0
    %v777 = vadd.f32 0.0, %v776
    %v778 = vpop.f32.mrf.mxu0
    %779 = vdwg.mxu0
    %v780 = vadd.f32 %v748, %v764
    %v781 = vxor.u32 %v780, 2147483648
    %v782 = vmul.f32 %v781, 1.442695
    %v783 = vpow.pop %v782
    %v784 = vadd.f32 %v783, 1.0
    %v785 = vrcp.pop %v784
    %v786 = vmul.f32 %v784, %v785
    %v787 = vsub.f32 1.0, %v786
    %v788 = vmul.f32 %v785, %v787
    %v789 = vadd.f32 %v785, %v788
    %vm790 = vweird.f32 %v784
    %vm791 = vweird.f32 %v785
    %vm792 = vmor %vm790, %vm791
    %v793 = vsel %vm792, %v785, %v789
    %v794 = vand.u32 2147483647, %v784
    %vm795 = vcmp.eq.f32.partialorder %v794, 8.507059e+37
    %v796 = vand.u32 %v784, 2147483648
    %v797 = vor.u32 1.1754944e-38, %v796
    %v798 = vsel %vm795, %v797, %v793
    %v799 = vmul.f32 1.0, %v798
    %v800 = vadd.f32 %v777, %v292
    %v801 = vmul.f32 %v799, %v800
    %v802 = vadd.f32 %v749, %v801
    %v803 = vtanh.pop %v802
    %v804 = vsub.f32 %v745, %v803
    %806 = vrot.lane.b32.xlu0 %v804, 64
    %v807 = vpop.permute.xlu0 %806
    %v809 = vmul.f32 %v799, %v807
    %811 = vrot.lane.b32.xlu0 %v809, 64
    %v812 = vpop.permute.xlu0 %811
    %v814 = vadd.f32 %v803, %v812
    %815 = vst.msk [vmem:[#allocation3 + $0x30] sm:$0xff] %vm158, %v814
    %816 = vst.msk [vmem:[#allocation3 + $0x8] sm:$0xff] %vm401, %v814
    %v817 = vld [vmem:[#allocation2 + $0x70] sm:$0xff]
    %v818 = vld [vmem:[#allocation2 + $0x78] sm:$0xff]
    %v819 = vpack.c.bf16 %v814, %v814
    %v821 = vsel %vm266, %v819, 0
    %823 = vmatpush.bf16.msra.mxu0 0
    %824 = vmatpush.bf16.msra.mxu0 0
    %825 = vmatpush.bf16.msra.mxu0 0
    %826 = vmatpush.bf16.msra.mxu0 0
    %827 = vmatpush.bf16.msra.mxu0 %v326
    %828 = vmatpush.bf16.msra.mxu0 %v324
    %829 = vmatpush.bf16.msra.mxu0 %v322
    %830 = vmatpush.bf16.msra.mxu0 %v320
    %831 = vmatmul.bf16.gmra.mxu0 %v821
    %v832 = vpop.f32.mrf.mxu0
    %v833 = vadd.f32 0.0, %v832
    %v834 = vpop.f32.mrf.mxu0
    %835 = vdwg.mxu0
    %836 = vmatpush.bf16.msra.mxu0 0
    %837 = vmatpush.bf16.msra.mxu0 0
    %838 = vmatpush.bf16.msra.mxu0 0
    %839 = vmatpush.bf16.msra.mxu0 0
    %840 = vmatpush.bf16.msra.mxu0 %v327
    %841 = vmatpush.bf16.msra.mxu0 %v325
    %842 = vmatpush.bf16.msra.mxu0 %v323
    %843 = vmatpush.bf16.msra.mxu0 %v321
    %844 = vmatmul.bf16.gmra.mxu0 %v821
    %v845 = vpop.f32.mrf.mxu0
    %v846 = vadd.f32 0.0, %v845
    %v847 = vpop.f32.mrf.mxu0
    %848 = vdwg.mxu0
    %v849 = vadd.f32 %v817, %v833
    %v850 = vxor.u32 %v849, 2147483648
    %v851 = vmul.f32 %v850, 1.442695
    %v852 = vpow.pop %v851
    %v853 = vadd.f32 %v852, 1.0
    %v854 = vrcp.pop %v853
    %v855 = vmul.f32 %v853, %v854
    %v856 = vsub.f32 1.0, %v855
    %v857 = vmul.f32 %v854, %v856
    %v858 = vadd.f32 %v854, %v857
    %vm859 = vweird.f32 %v853
    %vm860 = vweird.f32 %v854
    %vm861 = vmor %vm859, %vm860
    %v862 = vsel %vm861, %v854, %v858
    %v863 = vand.u32 2147483647, %v853
    %vm864 = vcmp.eq.f32.partialorder %v863, 8.507059e+37
    %v865 = vand.u32 %v853, 2147483648
    %v866 = vor.u32 1.1754944e-38, %v865
    %v867 = vsel %vm864, %v866, %v862
    %v868 = vmul.f32 1.0, %v867
    %v869 = vadd.f32 %v846, %v292
    %v870 = vmul.f32 %v868, %v869
    %v871 = vadd.f32 %v818, %v870
    %v872 = vtanh.pop %v871
    %v873 = vsub.f32 %v814, %v872
    %875 = vrot.lane.b32.xlu0 %v873, 64
    %v876 = vpop.permute.xlu0 %875
    %v878 = vmul.f32 %v868, %v876
    %880 = vrot.lane.b32.xlu0 %v878, 64
    %v881 = vpop.permute.xlu0 %880
    %v883 = vadd.f32 %v872, %v881
    %884 = vst.msk [vmem:[#allocation3 + $0x38] sm:$0xff] %vm158, %v883
    %885 = vst.msk [vmem:[#allocation3] sm:$0xff] %vm401, %v883
    %v886 = vld [vmem:[#allocation3] sm:$0xff]
    %v887 = vld [vmem:[#allocation3 + $0x8] sm:$0xff]
    %v888 = vld [vmem:[#allocation3 + $0x10] sm:$0xff]
    %v889 = vld [vmem:[#allocation3 + $0x18] sm:$0xff]
    %v890 = vld [vmem:[#allocation3 + $0x20] sm:$0xff]
    %v891 = vld [vmem:[#allocation3 + $0x28] sm:$0xff]
    %v892 = vld [vmem:[#allocation3 + $0x30] sm:$0xff]
    %v893 = vld [vmem:[#allocation3 + $0x38] sm:$0xff]
    %v894 = vld [vmem:[#allocation4] sm:$0xff]
    %v895 = vld [vmem:[#allocation4 + $0x8] sm:$0xff]
    %v896 = vld [vmem:[#allocation4 + $0x10] sm:$0xff]
    %v897 = vld [vmem:[#allocation4 + $0x18] sm:$0xff]
    %v898 = vld [vmem:[#allocation4 + $0x20] sm:$0xff]
    %v899 = vld [vmem:[#allocation4 + $0x28] sm:$0xff]
    %v900 = vld [vmem:[#allocation4 + $0x30] sm:$0xff]
    %v901 = vld [vmem:[#allocation4 + $0x38] sm:$0xff]
    %v902 = vld [vmem:[%s6] sm:$0x1]
    %v904 = vperm.slane %v902, 0
    %v907 = vsel %vm266, %v886, 0
    %v910 = vsel %vm266, %v887, 0
    %v913 = vsel %vm266, %v888, 0
    %v916 = vsel %vm266, %v889, 0
    %v919 = vsel %vm266, %v890, 0
    %v922 = vsel %vm266, %v891, 0
    %v925 = vsel %vm266, %v892, 0
    %v928 = vsel %vm266, %v893, 0
    %930 = vmatpush.msra.mxu0 0.0
    %931 = vmatpush.msra.mxu0 0.0
    %932 = vmatpush.msra.mxu0 0.0
    %933 = vmatpush.msra.mxu0 0.0
    %934 = vmatpush.msra.mxu0 0.0
    %935 = vmatpush.msra.mxu0 0.0
    %936 = vmatpush.msra.mxu0 0.0
    %937 = vmatpush.msra.mxu0 0.0
    %938 = vmatpush.msra.mxu0 %v901
    %939 = vmatpush.msra.mxu0 %v900
    %940 = vmatpush.msra.mxu0 %v899
    %941 = vmatpush.msra.mxu0 %v898
    %942 = vmatpush.msra.mxu0 %v897
    %943 = vmatpush.msra.mxu0 %v896
    %944 = vmatpush.msra.mxu0 %v895
    %945 = vmatpush.msra.mxu0 %v894
    %946 = vmatmul.f32.gmra.mxu0 %v907
    %v947 = vpop.f32.mrf.mxu0
    %v948 = vadd.f32 %v904, %v947
    %949 = vmatmul.f32.gmra.mxu0 %v910
    %v950 = vpop.f32.mrf.mxu0
    %v951 = vadd.f32 %v904, %v950
    %952 = vmatmul.f32.gmra.mxu0 %v913
    %v953 = vpop.f32.mrf.mxu0
    %v954 = vadd.f32 %v904, %v953
    %955 = vmatmul.f32.gmra.mxu0 %v916
    %v956 = vpop.f32.mrf.mxu0
    %v957 = vadd.f32 %v904, %v956
    %958 = vmatmul.f32.gmra.mxu0 %v919
    %v959 = vpop.f32.mrf.mxu0
    %v960 = vadd.f32 %v904, %v959
    %961 = vmatmul.f32.gmra.mxu0 %v922
    %v962 = vpop.f32.mrf.mxu0
    %v963 = vadd.f32 %v904, %v962
    %964 = vmatmul.f32.gmra.mxu0 %v925
    %v965 = vpop.f32.mrf.mxu0
    %v966 = vadd.f32 %v904, %v965
    %967 = vmatmul.f32.gmra.mxu0 %v928
    %v968 = vpop.f32.mrf.mxu0
    %v969 = vadd.f32 %v904, %v968
    %970 = vdwg.mxu0
    %971 = vst [vmem:[#allocation7] sm:$0xff] %v948
    %972 = vst [vmem:[#allocation7 + $0x8] sm:$0xff] %v951
    %973 = vst [vmem:[#allocation7 + $0x10] sm:$0xff] %v954
    %974 = vst [vmem:[#allocation7 + $0x18] sm:$0xff] %v957
    %975 = vst [vmem:[#allocation7 + $0x20] sm:$0xff] %v960
    %976 = vst [vmem:[#allocation7 + $0x28] sm:$0xff] %v963
    %977 = vst [vmem:[#allocation7 + $0x30] sm:$0xff] %v966
    %978 = vst [vmem:[#allocation7 + $0x38] sm:$0xff] %v969
    // Predicated region
    $region34: #{tpu_custom_call.1} parent=1 // pred_check
      _
    $region35: #{tpu_custom_call.1} parent=1 // pred_check_branch
      %980 = sbr.rel (0) target = $region37
    $region36: #{tpu_custom_call.1} parent=1 // pred_region
      %982 = vsyncadd [#allocation6], 0
      %s983 = sshll.u32 [#allocation7], 4
      %s984 = int_to_ptr.vmem [resolvable:$true] %s983
      %s985 = sshll.u32 %s7, 4
      %s986 = int_to_ptr.hbm [resolvable:$true] %s985
      %991 = dma.vmem_to_hbm [thread:$0]  %s984, 1024, %s986, [#allocation6], 128, 128, 8
    $region37: #{tpu_custom_call.1} parent=1 // pred_fallthru
      _
    // Predicated region
    $region38: #{tpu_custom_call.1} parent=1 // pred_check
      _
    $region39: #{tpu_custom_call.1} parent=1 // pred_check_branch
      %993 = sbr.rel (0) target = $region41
    $region40: #{tpu_custom_call.1} parent=1 // pred_region
      %995 = dma.done [#allocation6], 1024
    $region41: #{tpu_custom_call.1} parent=1 // pred_fallthru
      _
    %996 = vsyncpa [#allocation5], 1
    %997 = vsyncpa [#allocation6], 1

</llo_original>
